<compile_context>
chip_gen: v7x
topology: tpu7x:2x2x1
jax: 0.10.0
libtpu: 0.0.40
codegen_flags: <defaults>
</compile_context>

<pallas_src>
import functools

import jax
import jax.numpy as jnp
import numpy as np
from jax.experimental import pallas as pl
from jax.experimental.pallas import tpu as pltpu


# ----------------------------------------------------------------------------
# Wrapper-side weight expansion: dilated 3x3 conv -> ONE ky-stacked banded matrix
# acting on the lane-flattened, K-concatenated LHS, with the width-direction
# ReflectionPad folded directly into the matrix.
# ----------------------------------------------------------------------------
def _banded_weights_stacked(w_hwio, *, width, dilation, dtype):
    """(3,3,Cin,Cout) -> (3*width*Cin, width*Cout), ky-major along the K axis."""
    _, _, cin, cout = w_hwio.shape
    kx_i, ci_i, co_i, w_i = np.meshgrid(
        np.arange(3), np.arange(cin), np.arange(cout), np.arange(width), indexing="ij")
    # padded column w + kx*d with left pad d  ->  source column via reflection
    t = w_i + (kx_i - 1) * dilation
    t = np.where(t < 0, -t, t)
    t = np.where(t > width - 1, 2 * (width - 1) - t, t)
    rows = t * cin + ci_i
    cols = w_i * cout + co_i
    mats = []
    for ky in range(3):
        vals = w_hwio[ky][kx_i, ci_i, co_i]                   # (3, cin, cout, width)
        m = jnp.zeros((width * cin, width * cout), jnp.float32)
        mats.append(m.at[rows, cols].add(vals))               # .add: reflection can collide
    return jnp.concatenate(mats, axis=0).astype(dtype)        # cast AFTER accumulation


def _pick_batch_block(N, H, target_rows=256):
    """Largest divisor of N with B*H near the MXU-friendly M (respecting sublane tiling)."""
    cap = max(1, -(-target_rows // H))
    divs = [c for c in range(1, N + 1)
            if N % c == 0 and (c == N or (c * H) % 8 == 0)]
    fitting = [c for c in divs if c <= cap]
    return max(fitting) if fitting else min(divs)


# ----------------------------------------------------------------------------
# Fused kernel: one branch x one batch block per grid step; both ConvLayers,
# in-kernel reflection padding (rows), instance-norm and LeakyReLU.
# ----------------------------------------------------------------------------
def _make_block_kernel(*, B, H, W, Cin, Cout, dils, instance_norm, mxu_dtype, out_dtype):
    WC = W * Cout
    inv_h = 1.0 / float(H)

    def build_lhs(y, d):
        # y: (B*H, K) slab. Returns (B*H, 3K) = [L0 | L1 | L2]: the three dilated row taps
        # of a 3x3 conv with per-image row reflection folded in. ky=1 tap (L1) is y itself.
        l0, l2 = [], []
        for b in range(B):
            o = b * H
            top = [y[o + d - i: o + d - i + 1, :] for i in range(d)]        # rows d..1
            bot = [y[o + H - 2 - i: o + H - 1 - i, :] for i in range(d)]    # rows H-2..H-1-d
            l0 += top + [y[o: o + H - d, :]]
            l2 += [y[o + d: o + H, :]] + bot
        return jnp.concatenate(
            [jnp.concatenate(l0, axis=0), y, jnp.concatenate(l2, axis=0)], axis=1)

    def per_image_rowsum(y):
        # (B*H, WC) -> (B, WC): per-image sum over rows (aligned static slices, XLU reduce).
        return jnp.concatenate(
            [jnp.sum(y[b * H:(b + 1) * H, :], axis=0, keepdims=True) for b in range(B)],
            axis=0)

    def per_image_bcast(s):
        # (B, WC) -> (B*H, WC): broadcast each image's stats row back over its H rows.
        return jnp.concatenate(
            [jnp.broadcast_to(s[b:b + 1, :], (H, WC)) for b in range(B)], axis=0)

    def kernel(x_ref, wa_ref, wb_ref, aff_ref, pmat_ref, o_ref):
        j = pl.program_id(0)                               # branch index on the grid
        x2d = x_ref[...].astype(jnp.float32)               # (B*H, W*Cin), lane-dense
        pmat = pmat_ref[...] if instance_norm else None    # (WC, WC) f32, resident

        def conv3(y, d, w2d):
            # dilated 3x3 conv == ONE matmul: (B*H, 3K) @ (3K, WC), f32 accumulation
            lhs = build_lhs(y, d).astype(mxu_dtype)
            return jnp.dot(lhs, w2d, preferred_element_type=jnp.float32)

        def norm_act(y, aff_l):
            # aff_l: (3, WC) pre-tiled (bias, gamma, beta) in the (w*Cout + c) lane layout
            y = y + aff_l[0:1].astype(jnp.float32)
            if instance_norm:
                # two-pass per-image stats: row-sum first, then tiny pool-over-w matmuls
                # (numerically identical to pooling the full (H, WC) slab).
                mean = jnp.dot(per_image_rowsum(y), pmat,
                               preferred_element_type=jnp.float32) * inv_h
                cen = y - per_image_bcast(mean)
                var = jnp.dot(per_image_rowsum(cen * cen), pmat,
                              preferred_element_type=jnp.float32) * inv_h
                y = (cen * per_image_bcast(jax.lax.rsqrt(var + 1e-5))
                     * aff_l[1:2].astype(jnp.float32) + aff_l[2:3].astype(jnp.float32))
            return jnp.where(y >= 0.0, y, 0.2 * y)          # LeakyReLU(0.2)

        # Dilation must be static for the row slicing -> dispatch on the branch grid index.
        # All bodies are traced; only the matching one executes at runtime (scf.if).
        for idx, d in enumerate(dils):
            @pl.when(j == idx)
            def _(d=d):
                wa = wa_ref[0]                               # (3*W*Cin, WC), mxu dtype
                wb = wb_ref[0]                               # (3*WC,    WC), mxu dtype
                aff = aff_ref[0]                             # (2, 3, WC) f32
                # ConvLayer a (in -> out), then ConvLayer b (out -> out); the a->b
                # intermediate never leaves VMEM.
                ya = norm_act(conv3(x2d, d, wa), aff[0])
                yb = norm_act(conv3(ya, d, wb), aff[1])
                o_ref[0] = yb.astype(out_dtype)              # lane-dense (B*H, WC) store

    return kernel


# ----------------------------------------------------------------------------
# Public forward: NCHW in / NCHW out, exactly like the PyTorch module
# ----------------------------------------------------------------------------
def conv_multi_block_pallas(x_nchw, params, *, max_conv_size, instance_norm,
                            mxu_dtype=jnp.float32):
    N, Cin, H, W = x_nchw.shape
    ks = [k for k in (3, 5, 7, 9) if max_conv_size >= k]
    dils = [k // 2 for k in ks]
    nb = len(dils)
    Cout = params[f"conv_{ks[0]}a"]["w"].shape[-1]
    WC = W * Cout
    assert max(dils) <= min(H, W) - 1, "reflection pad requires pad < spatial dim"

    B = _pick_batch_block(N, H)                # batch block -> matmul M = B*H rows
    n_blocks = N // B

    # single boundary transpose fused with the lane-flattening reshape; rows = (n, h)
    x_in = jnp.transpose(x_nchw, (0, 2, 3, 1)).reshape(N * H, W * Cin)

    # ky-stacked banded conv weights (one matmul per conv), stored in the MXU feed dtype
    wa_all = jnp.stack([_banded_weights_stacked(params[f"conv_{k}a"]["w"], width=W,
                                                dilation=d, dtype=mxu_dtype)
                        for k, d in zip(ks, dils)])          # (nb, 3*W*Cin, WC)
    wb_all = jnp.stack([_banded_weights_stacked(params[f"conv_{k}b"]["w"], width=W,
                                                dilation=d, dtype=mxu_dtype)
                        for k, d in zip(ks, dils)])          # (nb, 3*WC,    WC)

    # bias / gamma / beta pre-tiled to the (w*Cout + c) lane layout, packed per branch
    def tile3(p):
        return jnp.stack([jnp.tile(p["b"], W), jnp.tile(p["gamma"], W), jnp.tile(p["beta"], W)])
    aff_all = jnp.stack([jnp.stack([tile3(params[f"conv_{k}a"]), tile3(params[f"conv_{k}b"])])
                         for k in ks]).astype(jnp.float32)   # (nb, 2, 3, WC)

    # "average over w groups, broadcast back" matrix; applied to per-image ROW SUMS only.
    lane = np.arange(WC)
    pmat = jnp.asarray(((lane[:, None] % Cout) == (lane[None, :] % Cout))
                       .astype(np.float32) / W)              # (WC, WC)

    kernel = _make_block_kernel(B=B, H=H, W=W, Cin=Cin, Cout=Cout, dils=dils,
                                instance_norm=instance_norm, mxu_dtype=mxu_dtype,
                                out_dtype=x_nchw.dtype)

    # Scoped-VMEM sizing: double-buffered revolving blocks + intermediates, capped so it
    # stays inside every generation's scoped budget (v7x: 32 MiB of 64 MiB physical).
    mxu_b = jnp.dtype(mxu_dtype).itemsize
    xb = jnp.dtype(x_nchw.dtype).itemsize
    est = (2 * (wa_all[0].size * mxu_b + wb_all[0].size * mxu_b + aff_all[0].size * 4
                + B * H * W * Cin * xb + B * H * WC * xb)
           + WC * WC * 4 + 6 * B * H * 3 * WC * 4)
    vmem_limit = int(min(max(2 * est, 16 * 1024 * 1024), 30 * 1024 * 1024))

    out = pl.pallas_call(
        kernel,
        out_shape=jax.ShapeDtypeStruct((nb, N * H, WC), x_nchw.dtype),
        grid=(nb, n_blocks),                                 # branch major, batch block minor
        in_specs=[
            pl.BlockSpec((B * H, W * Cin), lambda j, n: (n, 0)),
            pl.BlockSpec((1, 3 * W * Cin, WC), lambda j, n: (j, 0, 0)),
            pl.BlockSpec((1, 3 * WC, WC), lambda j, n: (j, 0, 0)),
            pl.BlockSpec((1, 2, 3, WC), lambda j, n: (j, 0, 0, 0)),
            pl.BlockSpec((WC, WC), lambda j, n: (0, 0)),
        ],
        out_specs=pl.BlockSpec((1, B * H, WC), lambda j, n: (j, n, 0)),
        compiler_params=pltpu.CompilerParams(
            dimension_semantics=("parallel", "parallel"),    # independent steps; v7x megacore
            vmem_limit_bytes=vmem_limit,
        ),
    )(x_in, wa_all, wb_all, aff_all, pmat)

    # (nb, N*H, WC) -> NCHW with branch-major channels (== torch.cat(dim=1)).
    # TODO(synk): a lane-dense NHWC consumer can take `out` directly and skip this HBM pass.
    out = out.reshape(nb, N, H, W, Cout)
    return jnp.transpose(out, (1, 0, 4, 2, 3)).reshape(N, nb * Cout, H, W)


# ----------------------------------------------------------------------------
# Parameters (deterministic, synthetic) — HWIO weights
# ----------------------------------------------------------------------------
def init_params(key, in_channels, out_channels, max_conv_size):
    params = {}
    for k in (3, 5, 7, 9):
        if max_conv_size >= k:
            for tag, cin in (("a", in_channels), ("b", out_channels)):
                key, k1, k2 = jax.random.split(key, 3)
                params[f"conv_{k}{tag}"] = dict(
                    w=0.1 * jax.random.normal(k1, (3, 3, cin, out_channels), jnp.float32),
                    b=0.05 * jax.random.normal(k2, (out_channels,), jnp.float32),
                    gamma=jnp.ones((out_channels,), jnp.float32),
                    beta=jnp.zeros((out_channels,), jnp.float32),
                )
    return params


# ----------------------------------------------------------------------------
# Pure-JAX reference (correctness check only)
# ----------------------------------------------------------------------------
def _ref_conv_layer(x, w, b, gamma, beta, *, dilation, instance_norm):
    p = dilation
    xp = jnp.pad(x, ((0, 0), (p, p), (p, p), (0, 0)), mode="reflect")
    y = jax.lax.conv_general_dilated(
        xp, w, window_strides=(1, 1), padding="VALID",
        rhs_dilation=(dilation, dilation),
        dimension_numbers=("NHWC", "HWIO", "NHWC"),
    ) + b
    if instance_norm:
        mean = jnp.mean(y, axis=(1, 2), keepdims=True)
        var = jnp.mean((y - mean) ** 2, axis=(1, 2), keepdims=True)
        y = (y - mean) * jax.lax.rsqrt(var + 1e-5) * gamma + beta
    return jnp.where(y >= 0, y, 0.2 * y)


def conv_multi_block_ref(x_nchw, params, *, max_conv_size, instance_norm):
    x = jnp.transpose(x_nchw, (0, 2, 3, 1))
    outs = []
    for k in (3, 5, 7, 9):
        if max_conv_size >= k:
            d = k // 2
            pa, pb = params[f"conv_{k}a"], params[f"conv_{k}b"]
            o = _ref_conv_layer(x, pa["w"], pa["b"], pa["gamma"], pa["beta"],
                                dilation=d, instance_norm=instance_norm)
            o = _ref_conv_layer(o, pb["w"], pb["b"], pb["gamma"], pb["beta"],
                                dilation=d, instance_norm=instance_norm)
            outs.append(o)
    return jnp.transpose(jnp.concatenate(outs, axis=-1), (0, 3, 1, 2))


if __name__ == "__main__":
    # batch=2, in_channels=4, out_channels=8, 16x16 spatial, branches {3,5}, instance_norm.
    N, Cin, Cout, H, W = 2, 4, 8, 16, 16
    max_conv_size, instance_norm = 5, True

    key = jax.random.PRNGKey(0)
    kx, kp = jax.random.split(key)
    x = jax.random.normal(kx, (N, Cin, H, W), jnp.float32)     # NCHW, like torch
    params = init_params(kp, Cin, Cout, max_conv_size)

    ref = conv_multi_block_ref(x, params,
                               max_conv_size=max_conv_size, instance_norm=instance_norm)

    # f32 MXU path: matches the f32 reference at tight tolerance
    fwd32 = jax.jit(functools.partial(conv_multi_block_pallas,
                                      max_conv_size=max_conv_size,
                                      instance_norm=instance_norm,
                                      mxu_dtype=jnp.float32))
    out32 = jax.block_until_ready(fwd32(x, params))
    assert out32.shape == (N, 2 * Cout, H, W), out32.shape
    np.testing.assert_allclose(np.asarray(out32), np.asarray(ref), rtol=1e-4, atol=1e-4)

    # bf16 MXU feed (perf mode): operand rounding only -> looser tolerance
    fwd16 = jax.jit(functools.partial(conv_multi_block_pallas,
                                      max_conv_size=max_conv_size,
                                      instance_norm=instance_norm,
                                      mxu_dtype=jnp.bfloat16))
    out16 = jax.block_until_ready(fwd16(x, params))
    np.testing.assert_allclose(np.asarray(out16), np.asarray(ref), rtol=5e-2, atol=5e-2)

    print("KERNEL_OK")
</pallas_src>

<mosaic_0001>
module attributes {stable_mosaic.version = 11 : i64} {
  func.func private @main(%arg0: i32) attributes {dimension_semantics = [#tpu.dimension_semantics<core_parallel>], iteration_bounds = array<i64: 2>, tpu.core_type = #tpu.core_type<sc_scalar_subcore>, window_params = []} {
    return
  }
}

module attributes {stable_mosaic.version = 11 : i64} {
  func.func private @main(%arg0: i32) attributes {dimension_semantics = [#tpu.dimension_semantics<core_parallel>], iteration_bounds = array<i64: 2>, tpu.core_type = #tpu.core_type<sc_scalar_subcore>, window_params = []} {
    return
  }
}

module attributes {stable_mosaic.version = 11 : i64} {
  func.func @kernel(%arg0: i32, %arg1: i32, %arg2: memref<32x64xf32, #tpu.memory_space<vmem>>, %arg3: memref<1x192x128xf32, #tpu.memory_space<vmem>>, %arg4: memref<1x384x128xf32, #tpu.memory_space<vmem>>, %arg5: memref<1x2x3x128xf32, #tpu.memory_space<vmem>>, %arg6: memref<128x128xf32, #tpu.memory_space<vmem>>, %arg7: memref<1x32x128xf32, #tpu.memory_space<vmem>>) attributes {dimension_semantics = [#tpu.dimension_semantics<parallel>, #tpu.dimension_semantics<parallel>], iteration_bounds = array<i64: 2, 1>, scalar_prefetch = 0 : i64, scratch_operands = 0 : i64, tpu.core_type = #tpu.core_type<tc>, window_params = [{transform_indices = @transform_0, window_bounds = array<i64: 32, 64>}, {transform_indices = @transform_1, window_bounds = array<i64: 1, 192, 128>}, {transform_indices = @transform_2, window_bounds = array<i64: 1, 384, 128>}, {transform_indices = @transform_3, window_bounds = array<i64: 1, 2, 3, 128>}, {pipeline_mode = #tpu.pipeline_mode<synchronous>, transform_indices = @transform_4, window_bounds = array<i64: 128, 128>}, {transform_indices = @transform_5, window_bounds = array<i64: 1, 32, 128>}]} {
    %c0 = arith.constant 0 : index
    %c0_0 = arith.constant 0 : index
    %0 = vector.load %arg2[%c0, %c0_0] : memref<32x64xf32, #tpu.memory_space<vmem>>, vector<32x64xf32>
    %c0_1 = arith.constant 0 : index
    %c0_2 = arith.constant 0 : index
    %1 = vector.load %arg6[%c0_1, %c0_2] : memref<128x128xf32, #tpu.memory_space<vmem>>, vector<128x128xf32>
    %c0_i32 = arith.constant 0 : i32
    %2 = arith.cmpi eq, %arg0, %c0_i32 : i32
    %3 = arith.extui %2 : i1 to i32
    %c0_i32_3 = arith.constant 0 : i32
    %4 = arith.cmpi ne, %3, %c0_i32_3 : i32
    scf.if %4 {
      %c0_5 = arith.constant 0 : index
      %c0_6 = arith.constant 0 : index
      %c0_7 = arith.constant 0 : index
      %8 = vector.load %arg3[%c0_5, %c0_6, %c0_7] : memref<1x192x128xf32, #tpu.memory_space<vmem>>, vector<1x192x128xf32>
      %9 = vector.shape_cast %8 : vector<1x192x128xf32> to vector<192x128xf32>
      %c0_8 = arith.constant 0 : index
      %c0_9 = arith.constant 0 : index
      %c0_10 = arith.constant 0 : index
      %10 = vector.load %arg4[%c0_8, %c0_9, %c0_10] : memref<1x384x128xf32, #tpu.memory_space<vmem>>, vector<1x384x128xf32>
      %11 = vector.shape_cast %10 : vector<1x384x128xf32> to vector<384x128xf32>
      %c0_11 = arith.constant 0 : index
      %c0_12 = arith.constant 0 : index
      %c0_13 = arith.constant 0 : index
      %c0_14 = arith.constant 0 : index
      %12 = vector.load %arg5[%c0_11, %c0_12, %c0_13, %c0_14] : memref<1x2x3x128xf32, #tpu.memory_space<vmem>>, vector<1x2x3x128xf32>
      %13 = vector.shape_cast %12 : vector<1x2x3x128xf32> to vector<2x3x128xf32>
      %14 = vector.extract_strided_slice %0 {offsets = [1, 0], sizes = [1, 64], strides = [1, 1]} : vector<32x64xf32> to vector<1x64xf32>
      %15 = vector.extract_strided_slice %0 {offsets = [14, 0], sizes = [1, 64], strides = [1, 1]} : vector<32x64xf32> to vector<1x64xf32>
      %16 = vector.extract_strided_slice %0 {offsets = [0, 0], sizes = [15, 64], strides = [1, 1]} : vector<32x64xf32> to vector<15x64xf32>
      %17 = vector.extract_strided_slice %0 {offsets = [1, 0], sizes = [15, 64], strides = [1, 1]} : vector<32x64xf32> to vector<15x64xf32>
      %18 = vector.extract_strided_slice %0 {offsets = [17, 0], sizes = [1, 64], strides = [1, 1]} : vector<32x64xf32> to vector<1x64xf32>
      %19 = vector.extract_strided_slice %0 {offsets = [30, 0], sizes = [1, 64], strides = [1, 1]} : vector<32x64xf32> to vector<1x64xf32>
      %20 = vector.extract_strided_slice %0 {offsets = [16, 0], sizes = [15, 64], strides = [1, 1]} : vector<32x64xf32> to vector<15x64xf32>
      %21 = vector.extract_strided_slice %0 {offsets = [17, 0], sizes = [15, 64], strides = [1, 1]} : vector<32x64xf32> to vector<15x64xf32>
      %22 = tpu.concatenate %14, %16, %18, %20 in 0 : vector<1x64xf32>, vector<15x64xf32>, vector<1x64xf32>, vector<15x64xf32> -> vector<32x64xf32>
      %23 = tpu.concatenate %17, %15, %21, %19 in 0 : vector<15x64xf32>, vector<1x64xf32>, vector<15x64xf32>, vector<1x64xf32> -> vector<32x64xf32>
      %24 = tpu.concatenate %22, %0, %23 in 1 : vector<32x64xf32>, vector<32x64xf32>, vector<32x64xf32> -> vector<32x192xf32>
      %cst = arith.constant dense<0.000000e+00> : vector<32x128xf32>
      %25 = tpu.matmul %24, %9, %cst {dimension_numbers = #tpu.dot_dimension_numbers<[1], [0], [0], [1], [0, 0, 1, 1], [], []>} : vector<32x192xf32>, vector<192x128xf32>, vector<32x128xf32> -> vector<32x128xf32>
      %26 = vector.extract_strided_slice %13 {offsets = [0, 0, 0], sizes = [1, 3, 128], strides = [1, 1, 1]} : vector<2x3x128xf32> to vector<1x3x128xf32>
      %27 = vector.shape_cast %26 : vector<1x3x128xf32> to vector<3x128xf32>
      %28 = vector.extract_strided_slice %27 {offsets = [0, 0], sizes = [1, 128], strides = [1, 1]} : vector<3x128xf32> to vector<1x128xf32>
      %29 = vector.broadcast %28 : vector<1x128xf32> to vector<32x128xf32>
      %30 = arith.addf %25, %29 : vector<32x128xf32>
      %31 = vector.extract_strided_slice %30 {offsets = [0, 0], sizes = [16, 128], strides = [1, 1]} : vector<32x128xf32> to vector<16x128xf32>
      %cst_15 = arith.constant dense<0.000000e+00> : vector<128xf32>
      %32 = vector.multi_reduction <add>, %31, %cst_15 [0] : vector<16x128xf32> to vector<128xf32>
      %33 = vector.shape_cast %32 : vector<128xf32> to vector<1x128xf32>
      %34 = vector.extract_strided_slice %30 {offsets = [16, 0], sizes = [16, 128], strides = [1, 1]} : vector<32x128xf32> to vector<16x128xf32>
      %cst_16 = arith.constant dense<0.000000e+00> : vector<128xf32>
      %35 = vector.multi_reduction <add>, %34, %cst_16 [0] : vector<16x128xf32> to vector<128xf32>
      %36 = vector.shape_cast %35 : vector<128xf32> to vector<1x128xf32>
      %37 = tpu.concatenate %33, %36 in 0 : vector<1x128xf32>, vector<1x128xf32> -> vector<2x128xf32>
      %cst_17 = arith.constant dense<0.000000e+00> : vector<2x128xf32>
      %38 = tpu.matmul %37, %1, %cst_17 {dimension_numbers = #tpu.dot_dimension_numbers<[1], [0], [0], [1], [0, 0, 1, 1], [], []>} : vector<2x128xf32>, vector<128x128xf32>, vector<2x128xf32> -> vector<2x128xf32>
      %cst_18 = arith.constant 6.250000e-02 : f32
      %39 = vector.broadcast %cst_18 : f32 to vector<2x128xf32>
      %40 = arith.mulf %38, %39 : vector<2x128xf32>
      %41 = vector.extract_strided_slice %40 {offsets = [0, 0], sizes = [1, 128], strides = [1, 1]} : vector<2x128xf32> to vector<1x128xf32>
      %42 = vector.shape_cast %41 : vector<1x128xf32> to vector<1x128xf32>
      %43 = vector.broadcast %42 : vector<1x128xf32> to vector<16x128xf32>
      %44 = vector.extract_strided_slice %40 {offsets = [1, 0], sizes = [1, 128], strides = [1, 1]} : vector<2x128xf32> to vector<1x128xf32>
      %45 = vector.shape_cast %44 : vector<1x128xf32> to vector<1x128xf32>
      %46 = vector.broadcast %45 : vector<1x128xf32> to vector<16x128xf32>
      %47 = tpu.concatenate %43, %46 in 0 : vector<16x128xf32>, vector<16x128xf32> -> vector<32x128xf32>
      %48 = arith.subf %30, %47 : vector<32x128xf32>
      %49 = arith.mulf %48, %48 : vector<32x128xf32>
      %50 = vector.extract_strided_slice %49 {offsets = [0, 0], sizes = [16, 128], strides = [1, 1]} : vector<32x128xf32> to vector<16x128xf32>
      %cst_19 = arith.constant dense<0.000000e+00> : vector<128xf32>
      %51 = vector.multi_reduction <add>, %50, %cst_19 [0] : vector<16x128xf32> to vector<128xf32>
      %52 = vector.shape_cast %51 : vector<128xf32> to vector<1x128xf32>
      %53 = vector.extract_strided_slice %49 {offsets = [16, 0], sizes = [16, 128], strides = [1, 1]} : vector<32x128xf32> to vector<16x128xf32>
      %cst_20 = arith.constant dense<0.000000e+00> : vector<128xf32>
      %54 = vector.multi_reduction <add>, %53, %cst_20 [0] : vector<16x128xf32> to vector<128xf32>
      %55 = vector.shape_cast %54 : vector<128xf32> to vector<1x128xf32>
      %56 = tpu.concatenate %52, %55 in 0 : vector<1x128xf32>, vector<1x128xf32> -> vector<2x128xf32>
      %cst_21 = arith.constant dense<0.000000e+00> : vector<2x128xf32>
      %57 = tpu.matmul %56, %1, %cst_21 {dimension_numbers = #tpu.dot_dimension_numbers<[1], [0], [0], [1], [0, 0, 1, 1], [], []>} : vector<2x128xf32>, vector<128x128xf32>, vector<2x128xf32> -> vector<2x128xf32>
      %cst_22 = arith.constant 6.250000e-02 : f32
      %58 = vector.broadcast %cst_22 : f32 to vector<2x128xf32>
      %59 = arith.mulf %57, %58 : vector<2x128xf32>
      %cst_23 = arith.constant 9.99999974E-6 : f32
      %60 = vector.broadcast %cst_23 : f32 to vector<2x128xf32>
      %61 = arith.addf %59, %60 : vector<2x128xf32>
      %62 = math.rsqrt %61 : vector<2x128xf32>
      %63 = vector.extract_strided_slice %62 {offsets = [0, 0], sizes = [1, 128], strides = [1, 1]} : vector<2x128xf32> to vector<1x128xf32>
      %64 = vector.shape_cast %63 : vector<1x128xf32> to vector<1x128xf32>
      %65 = vector.broadcast %64 : vector<1x128xf32> to vector<16x128xf32>
      %66 = vector.extract_strided_slice %62 {offsets = [1, 0], sizes = [1, 128], strides = [1, 1]} : vector<2x128xf32> to vector<1x128xf32>
      %67 = vector.shape_cast %66 : vector<1x128xf32> to vector<1x128xf32>
      %68 = vector.broadcast %67 : vector<1x128xf32> to vector<16x128xf32>
      %69 = tpu.concatenate %65, %68 in 0 : vector<16x128xf32>, vector<16x128xf32> -> vector<32x128xf32>
      %70 = arith.mulf %48, %69 : vector<32x128xf32>
      %71 = vector.extract_strided_slice %27 {offsets = [1, 0], sizes = [1, 128], strides = [1, 1]} : vector<3x128xf32> to vector<1x128xf32>
      %72 = vector.broadcast %71 : vector<1x128xf32> to vector<32x128xf32>
      %73 = arith.mulf %70, %72 : vector<32x128xf32>
      %74 = vector.extract_strided_slice %27 {offsets = [2, 0], sizes = [1, 128], strides = [1, 1]} : vector<3x128xf32> to vector<1x128xf32>
      %75 = vector.broadcast %74 : vector<1x128xf32> to vector<32x128xf32>
      %76 = arith.addf %73, %75 : vector<32x128xf32>
      %cst_24 = arith.constant 0.000000e+00 : f32
      %77 = vector.broadcast %cst_24 : f32 to vector<32x128xf32>
      %78 = arith.cmpf oge, %76, %77 : vector<32x128xf32>
      %cst_25 = arith.constant 2.000000e-01 : f32
      %79 = vector.broadcast %cst_25 : f32 to vector<32x128xf32>
      %80 = arith.mulf %79, %76 : vector<32x128xf32>
      %81 = arith.select %78, %76, %80 : vector<32x128xi1>, vector<32x128xf32>
      %82 = vector.extract_strided_slice %81 {offsets = [1, 0], sizes = [1, 128], strides = [1, 1]} : vector<32x128xf32> to vector<1x128xf32>
      %83 = vector.extract_strided_slice %81 {offsets = [14, 0], sizes = [1, 128], strides = [1, 1]} : vector<32x128xf32> to vector<1x128xf32>
      %84 = vector.extract_strided_slice %81 {offsets = [0, 0], sizes = [15, 128], strides = [1, 1]} : vector<32x128xf32> to vector<15x128xf32>
      %85 = vector.extract_strided_slice %81 {offsets = [1, 0], sizes = [15, 128], strides = [1, 1]} : vector<32x128xf32> to vector<15x128xf32>
      %86 = vector.extract_strided_slice %81 {offsets = [17, 0], sizes = [1, 128], strides = [1, 1]} : vector<32x128xf32> to vector<1x128xf32>
      %87 = vector.extract_strided_slice %81 {offsets = [30, 0], sizes = [1, 128], strides = [1, 1]} : vector<32x128xf32> to vector<1x128xf32>
      %88 = vector.extract_strided_slice %81 {offsets = [16, 0], sizes = [15, 128], strides = [1, 1]} : vector<32x128xf32> to vector<15x128xf32>
      %89 = vector.extract_strided_slice %81 {offsets = [17, 0], sizes = [15, 128], strides = [1, 1]} : vector<32x128xf32> to vector<15x128xf32>
      %90 = tpu.concatenate %82, %84, %86, %88 in 0 : vector<1x128xf32>, vector<15x128xf32>, vector<1x128xf32>, vector<15x128xf32> -> vector<32x128xf32>
      %91 = tpu.concatenate %85, %83, %89, %87 in 0 : vector<15x128xf32>, vector<1x128xf32>, vector<15x128xf32>, vector<1x128xf32> -> vector<32x128xf32>
      %92 = tpu.concatenate %90, %81, %91 in 1 : vector<32x128xf32>, vector<32x128xf32>, vector<32x128xf32> -> vector<32x384xf32>
      %cst_26 = arith.constant dense<0.000000e+00> : vector<32x128xf32>
      %93 = tpu.matmul %92, %11, %cst_26 {dimension_numbers = #tpu.dot_dimension_numbers<[1], [0], [0], [1], [0, 0, 1, 1], [], []>} : vector<32x384xf32>, vector<384x128xf32>, vector<32x128xf32> -> vector<32x128xf32>
      %94 = vector.extract_strided_slice %13 {offsets = [1, 0, 0], sizes = [1, 3, 128], strides = [1, 1, 1]} : vector<2x3x128xf32> to vector<1x3x128xf32>
      %95 = vector.shape_cast %94 : vector<1x3x128xf32> to vector<3x128xf32>
      %96 = vector.extract_strided_slice %95 {offsets = [0, 0], sizes = [1, 128], strides = [1, 1]} : vector<3x128xf32> to vector<1x128xf32>
      %97 = vector.broadcast %96 : vector<1x128xf32> to vector<32x128xf32>
      %98 = arith.addf %93, %97 : vector<32x128xf32>
      %99 = vector.extract_strided_slice %98 {offsets = [0, 0], sizes = [16, 128], strides = [1, 1]} : vector<32x128xf32> to vector<16x128xf32>
      %cst_27 = arith.constant dense<0.000000e+00> : vector<128xf32>
      %100 = vector.multi_reduction <add>, %99, %cst_27 [0] : vector<16x128xf32> to vector<128xf32>
      %101 = vector.shape_cast %100 : vector<128xf32> to vector<1x128xf32>
      %102 = vector.extract_strided_slice %98 {offsets = [16, 0], sizes = [16, 128], strides = [1, 1]} : vector<32x128xf32> to vector<16x128xf32>
      %cst_28 = arith.constant dense<0.000000e+00> : vector<128xf32>
      %103 = vector.multi_reduction <add>, %102, %cst_28 [0] : vector<16x128xf32> to vector<128xf32>
      %104 = vector.shape_cast %103 : vector<128xf32> to vector<1x128xf32>
      %105 = tpu.concatenate %101, %104 in 0 : vector<1x128xf32>, vector<1x128xf32> -> vector<2x128xf32>
      %cst_29 = arith.constant dense<0.000000e+00> : vector<2x128xf32>
      %106 = tpu.matmul %105, %1, %cst_29 {dimension_numbers = #tpu.dot_dimension_numbers<[1], [0], [0], [1], [0, 0, 1, 1], [], []>} : vector<2x128xf32>, vector<128x128xf32>, vector<2x128xf32> -> vector<2x128xf32>
      %cst_30 = arith.constant 6.250000e-02 : f32
      %107 = vector.broadcast %cst_30 : f32 to vector<2x128xf32>
      %108 = arith.mulf %106, %107 : vector<2x128xf32>
      %109 = vector.extract_strided_slice %108 {offsets = [0, 0], sizes = [1, 128], strides = [1, 1]} : vector<2x128xf32> to vector<1x128xf32>
      %110 = vector.shape_cast %109 : vector<1x128xf32> to vector<1x128xf32>
      %111 = vector.broadcast %110 : vector<1x128xf32> to vector<16x128xf32>
      %112 = vector.extract_strided_slice %108 {offsets = [1, 0], sizes = [1, 128], strides = [1, 1]} : vector<2x128xf32> to vector<1x128xf32>
      %113 = vector.shape_cast %112 : vector<1x128xf32> to vector<1x128xf32>
      %114 = vector.broadcast %113 : vector<1x128xf32> to vector<16x128xf32>
      %115 = tpu.concatenate %111, %114 in 0 : vector<16x128xf32>, vector<16x128xf32> -> vector<32x128xf32>
      %116 = arith.subf %98, %115 : vector<32x128xf32>
      %117 = arith.mulf %116, %116 : vector<32x128xf32>
      %118 = vector.extract_strided_slice %117 {offsets = [0, 0], sizes = [16, 128], strides = [1, 1]} : vector<32x128xf32> to vector<16x128xf32>
      %cst_31 = arith.constant dense<0.000000e+00> : vector<128xf32>
      %119 = vector.multi_reduction <add>, %118, %cst_31 [0] : vector<16x128xf32> to vector<128xf32>
      %120 = vector.shape_cast %119 : vector<128xf32> to vector<1x128xf32>
      %121 = vector.extract_strided_slice %117 {offsets = [16, 0], sizes = [16, 128], strides = [1, 1]} : vector<32x128xf32> to vector<16x128xf32>
      %cst_32 = arith.constant dense<0.000000e+00> : vector<128xf32>
      %122 = vector.multi_reduction <add>, %121, %cst_32 [0] : vector<16x128xf32> to vector<128xf32>
      %123 = vector.shape_cast %122 : vector<128xf32> to vector<1x128xf32>
      %124 = tpu.concatenate %120, %123 in 0 : vector<1x128xf32>, vector<1x128xf32> -> vector<2x128xf32>
      %cst_33 = arith.constant dense<0.000000e+00> : vector<2x128xf32>
      %125 = tpu.matmul %124, %1, %cst_33 {dimension_numbers = #tpu.dot_dimension_numbers<[1], [0], [0], [1], [0, 0, 1, 1], [], []>} : vector<2x128xf32>, vector<128x128xf32>, vector<2x128xf32> -> vector<2x128xf32>
      %cst_34 = arith.constant 6.250000e-02 : f32
      %126 = vector.broadcast %cst_34 : f32 to vector<2x128xf32>
      %127 = arith.mulf %125, %126 : vector<2x128xf32>
      %cst_35 = arith.constant 9.99999974E-6 : f32
      %128 = vector.broadcast %cst_35 : f32 to vector<2x128xf32>
      %129 = arith.addf %127, %128 : vector<2x128xf32>
      %130 = math.rsqrt %129 : vector<2x128xf32>
      %131 = vector.extract_strided_slice %130 {offsets = [0, 0], sizes = [1, 128], strides = [1, 1]} : vector<2x128xf32> to vector<1x128xf32>
      %132 = vector.shape_cast %131 : vector<1x128xf32> to vector<1x128xf32>
      %133 = vector.broadcast %132 : vector<1x128xf32> to vector<16x128xf32>
      %134 = vector.extract_strided_slice %130 {offsets = [1, 0], sizes = [1, 128], strides = [1, 1]} : vector<2x128xf32> to vector<1x128xf32>
      %135 = vector.shape_cast %134 : vector<1x128xf32> to vector<1x128xf32>
      %136 = vector.broadcast %135 : vector<1x128xf32> to vector<16x128xf32>
      %137 = tpu.concatenate %133, %136 in 0 : vector<16x128xf32>, vector<16x128xf32> -> vector<32x128xf32>
      %138 = arith.mulf %116, %137 : vector<32x128xf32>
      %139 = vector.extract_strided_slice %95 {offsets = [1, 0], sizes = [1, 128], strides = [1, 1]} : vector<3x128xf32> to vector<1x128xf32>
      %140 = vector.broadcast %139 : vector<1x128xf32> to vector<32x128xf32>
      %141 = arith.mulf %138, %140 : vector<32x128xf32>
      %142 = vector.extract_strided_slice %95 {offsets = [2, 0], sizes = [1, 128], strides = [1, 1]} : vector<3x128xf32> to vector<1x128xf32>
      %143 = vector.broadcast %142 : vector<1x128xf32> to vector<32x128xf32>
      %144 = arith.addf %141, %143 : vector<32x128xf32>
      %cst_36 = arith.constant 0.000000e+00 : f32
      %145 = vector.broadcast %cst_36 : f32 to vector<32x128xf32>
      %146 = arith.cmpf oge, %144, %145 : vector<32x128xf32>
      %cst_37 = arith.constant 2.000000e-01 : f32
      %147 = vector.broadcast %cst_37 : f32 to vector<32x128xf32>
      %148 = arith.mulf %147, %144 : vector<32x128xf32>
      %149 = arith.select %146, %144, %148 : vector<32x128xi1>, vector<32x128xf32>
      %c0_38 = arith.constant 0 : index
      %c0_39 = arith.constant 0 : index
      %c0_40 = arith.constant 0 : index
      %150 = vector.load %arg7[%c0_38, %c0_39, %c0_40] : memref<1x32x128xf32, #tpu.memory_space<vmem>>, vector<1x32x128xf32>
      %151 = vector.shape_cast %150 : vector<1x32x128xf32> to vector<32x128xf32>
      %152 = vector.shape_cast %149 : vector<32x128xf32> to vector<1x32x128xf32>
      tpu.vector_store %arg7[%c0_38, %c0_39, %c0_40], %152 {strides = array<i32>} : memref<1x32x128xf32, #tpu.memory_space<vmem>>, vector<1x32x128xf32>,
    } else {
    }
    %c1_i32 = arith.constant 1 : i32
    %5 = arith.cmpi eq, %arg0, %c1_i32 : i32
    %6 = arith.extui %5 : i1 to i32
    %c0_i32_4 = arith.constant 0 : i32
    %7 = arith.cmpi ne, %6, %c0_i32_4 : i32
    scf.if %7 {
      %c0_5 = arith.constant 0 : index
      %c0_6 = arith.constant 0 : index
      %c0_7 = arith.constant 0 : index
      %8 = vector.load %arg3[%c0_5, %c0_6, %c0_7] : memref<1x192x128xf32, #tpu.memory_space<vmem>>, vector<1x192x128xf32>
      %9 = vector.shape_cast %8 : vector<1x192x128xf32> to vector<192x128xf32>
      %c0_8 = arith.constant 0 : index
      %c0_9 = arith.constant 0 : index
      %c0_10 = arith.constant 0 : index
      %10 = vector.load %arg4[%c0_8, %c0_9, %c0_10] : memref<1x384x128xf32, #tpu.memory_space<vmem>>, vector<1x384x128xf32>
      %11 = vector.shape_cast %10 : vector<1x384x128xf32> to vector<384x128xf32>
      %c0_11 = arith.constant 0 : index
      %c0_12 = arith.constant 0 : index
      %c0_13 = arith.constant 0 : index
      %c0_14 = arith.constant 0 : index
      %12 = vector.load %arg5[%c0_11, %c0_12, %c0_13, %c0_14] : memref<1x2x3x128xf32, #tpu.memory_space<vmem>>, vector<1x2x3x128xf32>
      %13 = vector.shape_cast %12 : vector<1x2x3x128xf32> to vector<2x3x128xf32>
      %14 = vector.extract_strided_slice %0 {offsets = [2, 0], sizes = [1, 64], strides = [1, 1]} : vector<32x64xf32> to vector<1x64xf32>
      %15 = vector.extract_strided_slice %0 {offsets = [1, 0], sizes = [1, 64], strides = [1, 1]} : vector<32x64xf32> to vector<1x64xf32>
      %16 = vector.extract_strided_slice %0 {offsets = [14, 0], sizes = [1, 64], strides = [1, 1]} : vector<32x64xf32> to vector<1x64xf32>
      %17 = vector.extract_strided_slice %0 {offsets = [13, 0], sizes = [1, 64], strides = [1, 1]} : vector<32x64xf32> to vector<1x64xf32>
      %18 = vector.extract_strided_slice %0 {offsets = [0, 0], sizes = [14, 64], strides = [1, 1]} : vector<32x64xf32> to vector<14x64xf32>
      %19 = vector.extract_strided_slice %0 {offsets = [2, 0], sizes = [14, 64], strides = [1, 1]} : vector<32x64xf32> to vector<14x64xf32>
      %20 = vector.extract_strided_slice %0 {offsets = [18, 0], sizes = [1, 64], strides = [1, 1]} : vector<32x64xf32> to vector<1x64xf32>
      %21 = vector.extract_strided_slice %0 {offsets = [17, 0], sizes = [1, 64], strides = [1, 1]} : vector<32x64xf32> to vector<1x64xf32>
      %22 = vector.extract_strided_slice %0 {offsets = [30, 0], sizes = [1, 64], strides = [1, 1]} : vector<32x64xf32> to vector<1x64xf32>
      %23 = vector.extract_strided_slice %0 {offsets = [29, 0], sizes = [1, 64], strides = [1, 1]} : vector<32x64xf32> to vector<1x64xf32>
      %24 = vector.extract_strided_slice %0 {offsets = [16, 0], sizes = [14, 64], strides = [1, 1]} : vector<32x64xf32> to vector<14x64xf32>
      %25 = vector.extract_strided_slice %0 {offsets = [18, 0], sizes = [14, 64], strides = [1, 1]} : vector<32x64xf32> to vector<14x64xf32>
      %26 = tpu.concatenate %14, %15, %18, %20, %21, %24 in 0 : vector<1x64xf32>, vector<1x64xf32>, vector<14x64xf32>, vector<1x64xf32>, vector<1x64xf32>, vector<14x64xf32> -> vector<32x64xf32>
      %27 = tpu.concatenate %19, %16, %17, %25, %22, %23 in 0 : vector<14x64xf32>, vector<1x64xf32>, vector<1x64xf32>, vector<14x64xf32>, vector<1x64xf32>, vector<1x64xf32> -> vector<32x64xf32>
      %28 = tpu.concatenate %26, %0, %27 in 1 : vector<32x64xf32>, vector<32x64xf32>, vector<32x64xf32> -> vector<32x192xf32>
      %cst = arith.constant dense<0.000000e+00> : vector<32x128xf32>
      %29 = tpu.matmul %28, %9, %cst {dimension_numbers = #tpu.dot_dimension_numbers<[1], [0], [0], [1], [0, 0, 1, 1], [], []>} : vector<32x192xf32>, vector<192x128xf32>, vector<32x128xf32> -> vector<32x128xf32>
      %30 = vector.extract_strided_slice %13 {offsets = [0, 0, 0], sizes = [1, 3, 128], strides = [1, 1, 1]} : vector<2x3x128xf32> to vector<1x3x128xf32>
      %31 = vector.shape_cast %30 : vector<1x3x128xf32> to vector<3x128xf32>
      %32 = vector.extract_strided_slice %31 {offsets = [0, 0], sizes = [1, 128], strides = [1, 1]} : vector<3x128xf32> to vector<1x128xf32>
      %33 = vector.broadcast %32 : vector<1x128xf32> to vector<32x128xf32>
      %34 = arith.addf %29, %33 : vector<32x128xf32>
      %35 = vector.extract_strided_slice %34 {offsets = [0, 0], sizes = [16, 128], strides = [1, 1]} : vector<32x128xf32> to vector<16x128xf32>
      %cst_15 = arith.constant dense<0.000000e+00> : vector<128xf32>
      %36 = vector.multi_reduction <add>, %35, %cst_15 [0] : vector<16x128xf32> to vector<128xf32>
      %37 = vector.shape_cast %36 : vector<128xf32> to vector<1x128xf32>
      %38 = vector.extract_strided_slice %34 {offsets = [16, 0], sizes = [16, 128], strides = [1, 1]} : vector<32x128xf32> to vector<16x128xf32>
      %cst_16 = arith.constant dense<0.000000e+00> : vector<128xf32>
      %39 = vector.multi_reduction <add>, %38, %cst_16 [0] : vector<16x128xf32> to vector<128xf32>
      %40 = vector.shape_cast %39 : vector<128xf32> to vector<1x128xf32>
      %41 = tpu.concatenate %37, %40 in 0 : vector<1x128xf32>, vector<1x128xf32> -> vector<2x128xf32>
      %cst_17 = arith.constant dense<0.000000e+00> : vector<2x128xf32>
      %42 = tpu.matmul %41, %1, %cst_17 {dimension_numbers = #tpu.dot_dimension_numbers<[1], [0], [0], [1], [0, 0, 1, 1], [], []>} : vector<2x128xf32>, vector<128x128xf32>, vector<2x128xf32> -> vector<2x128xf32>
      %cst_18 = arith.constant 6.250000e-02 : f32
      %43 = vector.broadcast %cst_18 : f32 to vector<2x128xf32>
      %44 = arith.mulf %42, %43 : vector<2x128xf32>
      %45 = vector.extract_strided_slice %44 {offsets = [0, 0], sizes = [1, 128], strides = [1, 1]} : vector<2x128xf32> to vector<1x128xf32>
      %46 = vector.shape_cast %45 : vector<1x128xf32> to vector<1x128xf32>
      %47 = vector.broadcast %46 : vector<1x128xf32> to vector<16x128xf32>
      %48 = vector.extract_strided_slice %44 {offsets = [1, 0], sizes = [1, 128], strides = [1, 1]} : vector<2x128xf32> to vector<1x128xf32>
      %49 = vector.shape_cast %48 : vector<1x128xf32> to vector<1x128xf32>
      %50 = vector.broadcast %49 : vector<1x128xf32> to vector<16x128xf32>
      %51 = tpu.concatenate %47, %50 in 0 : vector<16x128xf32>, vector<16x128xf32> -> vector<32x128xf32>
      %52 = arith.subf %34, %51 : vector<32x128xf32>
      %53 = arith.mulf %52, %52 : vector<32x128xf32>
      %54 = vector.extract_strided_slice %53 {offsets = [0, 0], sizes = [16, 128], strides = [1, 1]} : vector<32x128xf32> to vector<16x128xf32>
      %cst_19 = arith.constant dense<0.000000e+00> : vector<128xf32>
      %55 = vector.multi_reduction <add>, %54, %cst_19 [0] : vector<16x128xf32> to vector<128xf32>
      %56 = vector.shape_cast %55 : vector<128xf32> to vector<1x128xf32>
      %57 = vector.extract_strided_slice %53 {offsets = [16, 0], sizes = [16, 128], strides = [1, 1]} : vector<32x128xf32> to vector<16x128xf32>
      %cst_20 = arith.constant dense<0.000000e+00> : vector<128xf32>
      %58 = vector.multi_reduction <add>, %57, %cst_20 [0] : vector<16x128xf32> to vector<128xf32>
      %59 = vector.shape_cast %58 : vector<128xf32> to vector<1x128xf32>
      %60 = tpu.concatenate %56, %59 in 0 : vector<1x128xf32>, vector<1x128xf32> -> vector<2x128xf32>
      %cst_21 = arith.constant dense<0.000000e+00> : vector<2x128xf32>
      %61 = tpu.matmul %60, %1, %cst_21 {dimension_numbers = #tpu.dot_dimension_numbers<[1], [0], [0], [1], [0, 0, 1, 1], [], []>} : vector<2x128xf32>, vector<128x128xf32>, vector<2x128xf32> -> vector<2x128xf32>
      %cst_22 = arith.constant 6.250000e-02 : f32
      %62 = vector.broadcast %cst_22 : f32 to vector<2x128xf32>
      %63 = arith.mulf %61, %62 : vector<2x128xf32>
      %cst_23 = arith.constant 9.99999974E-6 : f32
      %64 = vector.broadcast %cst_23 : f32 to vector<2x128xf32>
      %65 = arith.addf %63, %64 : vector<2x128xf32>
      %66 = math.rsqrt %65 : vector<2x128xf32>
      %67 = vector.extract_strided_slice %66 {offsets = [0, 0], sizes = [1, 128], strides = [1, 1]} : vector<2x128xf32> to vector<1x128xf32>
      %68 = vector.shape_cast %67 : vector<1x128xf32> to vector<1x128xf32>
      %69 = vector.broadcast %68 : vector<1x128xf32> to vector<16x128xf32>
      %70 = vector.extract_strided_slice %66 {offsets = [1, 0], sizes = [1, 128], strides = [1, 1]} : vector<2x128xf32> to vector<1x128xf32>
      %71 = vector.shape_cast %70 : vector<1x128xf32> to vector<1x128xf32>
      %72 = vector.broadcast %71 : vector<1x128xf32> to vector<16x128xf32>
      %73 = tpu.concatenate %69, %72 in 0 : vector<16x128xf32>, vector<16x128xf32> -> vector<32x128xf32>
      %74 = arith.mulf %52, %73 : vector<32x128xf32>
      %75 = vector.extract_strided_slice %31 {offsets = [1, 0], sizes = [1, 128], strides = [1, 1]} : vector<3x128xf32> to vector<1x128xf32>
      %76 = vector.broadcast %75 : vector<1x128xf32> to vector<32x128xf32>
      %77 = arith.mulf %74, %76 : vector<32x128xf32>
      %78 = vector.extract_strided_slice %31 {offsets = [2, 0], sizes = [1, 128], strides = [1, 1]} : vector<3x128xf32> to vector<1x128xf32>
      %79 = vector.broadcast %78 : vector<1x128xf32> to vector<32x128xf32>
      %80 = arith.addf %77, %79 : vector<32x128xf32>
      %cst_24 = arith.constant 0.000000e+00 : f32
      %81 = vector.broadcast %cst_24 : f32 to vector<32x128xf32>
      %82 = arith.cmpf oge, %80, %81 : vector<32x128xf32>
      %cst_25 = arith.constant 2.000000e-01 : f32
      %83 = vector.broadcast %cst_25 : f32 to vector<32x128xf32>
      %84 = arith.mulf %83, %80 : vector<32x128xf32>
      %85 = arith.select %82, %80, %84 : vector<32x128xi1>, vector<32x128xf32>
      %86 = vector.extract_strided_slice %85 {offsets = [2, 0], sizes = [1, 128], strides = [1, 1]} : vector<32x128xf32> to vector<1x128xf32>
      %87 = vector.extract_strided_slice %85 {offsets = [1, 0], sizes = [1, 128], strides = [1, 1]} : vector<32x128xf32> to vector<1x128xf32>
      %88 = vector.extract_strided_slice %85 {offsets = [14, 0], sizes = [1, 128], strides = [1, 1]} : vector<32x128xf32> to vector<1x128xf32>
      %89 = vector.extract_strided_slice %85 {offsets = [13, 0], sizes = [1, 128], strides = [1, 1]} : vector<32x128xf32> to vector<1x128xf32>
      %90 = vector.extract_strided_slice %85 {offsets = [0, 0], sizes = [14, 128], strides = [1, 1]} : vector<32x128xf32> to vector<14x128xf32>
      %91 = vector.extract_strided_slice %85 {offsets = [2, 0], sizes = [14, 128], strides = [1, 1]} : vector<32x128xf32> to vector<14x128xf32>
      %92 = vector.extract_strided_slice %85 {offsets = [18, 0], sizes = [1, 128], strides = [1, 1]} : vector<32x128xf32> to vector<1x128xf32>
      %93 = vector.extract_strided_slice %85 {offsets = [17, 0], sizes = [1, 128], strides = [1, 1]} : vector<32x128xf32> to vector<1x128xf32>
      %94 = vector.extract_strided_slice %85 {offsets = [30, 0], sizes = [1, 128], strides = [1, 1]} : vector<32x128xf32> to vector<1x128xf32>
      %95 = vector.extract_strided_slice %85 {offsets = [29, 0], sizes = [1, 128], strides = [1, 1]} : vector<32x128xf32> to vector<1x128xf32>
      %96 = vector.extract_strided_slice %85 {offsets = [16, 0], sizes = [14, 128], strides = [1, 1]} : vector<32x128xf32> to vector<14x128xf32>
      %97 = vector.extract_strided_slice %85 {offsets = [18, 0], sizes = [14, 128], strides = [1, 1]} : vector<32x128xf32> to vector<14x128xf32>
      %98 = tpu.concatenate %86, %87, %90, %92, %93, %96 in 0 : vector<1x128xf32>, vector<1x128xf32>, vector<14x128xf32>, vector<1x128xf32>, vector<1x128xf32>, vector<14x128xf32> -> vector<32x128xf32>
      %99 = tpu.concatenate %91, %88, %89, %97, %94, %95 in 0 : vector<14x128xf32>, vector<1x128xf32>, vector<1x128xf32>, vector<14x128xf32>, vector<1x128xf32>, vector<1x128xf32> -> vector<32x128xf32>
      %100 = tpu.concatenate %98, %85, %99 in 1 : vector<32x128xf32>, vector<32x128xf32>, vector<32x128xf32> -> vector<32x384xf32>
      %cst_26 = arith.constant dense<0.000000e+00> : vector<32x128xf32>
      %101 = tpu.matmul %100, %11, %cst_26 {dimension_numbers = #tpu.dot_dimension_numbers<[1], [0], [0], [1], [0, 0, 1, 1], [], []>} : vector<32x384xf32>, vector<384x128xf32>, vector<32x128xf32> -> vector<32x128xf32>
      %102 = vector.extract_strided_slice %13 {offsets = [1, 0, 0], sizes = [1, 3, 128], strides = [1, 1, 1]} : vector<2x3x128xf32> to vector<1x3x128xf32>
      %103 = vector.shape_cast %102 : vector<1x3x128xf32> to vector<3x128xf32>
      %104 = vector.extract_strided_slice %103 {offsets = [0, 0], sizes = [1, 128], strides = [1, 1]} : vector<3x128xf32> to vector<1x128xf32>
      %105 = vector.broadcast %104 : vector<1x128xf32> to vector<32x128xf32>
      %106 = arith.addf %101, %105 : vector<32x128xf32>
      %107 = vector.extract_strided_slice %106 {offsets = [0, 0], sizes = [16, 128], strides = [1, 1]} : vector<32x128xf32> to vector<16x128xf32>
      %cst_27 = arith.constant dense<0.000000e+00> : vector<128xf32>
      %108 = vector.multi_reduction <add>, %107, %cst_27 [0] : vector<16x128xf32> to vector<128xf32>
      %109 = vector.shape_cast %108 : vector<128xf32> to vector<1x128xf32>
      %110 = vector.extract_strided_slice %106 {offsets = [16, 0], sizes = [16, 128], strides = [1, 1]} : vector<32x128xf32> to vector<16x128xf32>
      %cst_28 = arith.constant dense<0.000000e+00> : vector<128xf32>
      %111 = vector.multi_reduction <add>, %110, %cst_28 [0] : vector<16x128xf32> to vector<128xf32>
      %112 = vector.shape_cast %111 : vector<128xf32> to vector<1x128xf32>
      %113 = tpu.concatenate %109, %112 in 0 : vector<1x128xf32>, vector<1x128xf32> -> vector<2x128xf32>
      %cst_29 = arith.constant dense<0.000000e+00> : vector<2x128xf32>
      %114 = tpu.matmul %113, %1, %cst_29 {dimension_numbers = #tpu.dot_dimension_numbers<[1], [0], [0], [1], [0, 0, 1, 1], [], []>} : vector<2x128xf32>, vector<128x128xf32>, vector<2x128xf32> -> vector<2x128xf32>
      %cst_30 = arith.constant 6.250000e-02 : f32
      %115 = vector.broadcast %cst_30 : f32 to vector<2x128xf32>
      %116 = arith.mulf %114, %115 : vector<2x128xf32>
      %117 = vector.extract_strided_slice %116 {offsets = [0, 0], sizes = [1, 128], strides = [1, 1]} : vector<2x128xf32> to vector<1x128xf32>
      %118 = vector.shape_cast %117 : vector<1x128xf32> to vector<1x128xf32>
      %119 = vector.broadcast %118 : vector<1x128xf32> to vector<16x128xf32>
      %120 = vector.extract_strided_slice %116 {offsets = [1, 0], sizes = [1, 128], strides = [1, 1]} : vector<2x128xf32> to vector<1x128xf32>
      %121 = vector.shape_cast %120 : vector<1x128xf32> to vector<1x128xf32>
      %122 = vector.broadcast %121 : vector<1x128xf32> to vector<16x128xf32>
      %123 = tpu.concatenate %119, %122 in 0 : vector<16x128xf32>, vector<16x128xf32> -> vector<32x128xf32>
      %124 = arith.subf %106, %123 : vector<32x128xf32>
      %125 = arith.mulf %124, %124 : vector<32x128xf32>
      %126 = vector.extract_strided_slice %125 {offsets = [0, 0], sizes = [16, 128], strides = [1, 1]} : vector<32x128xf32> to vector<16x128xf32>
      %cst_31 = arith.constant dense<0.000000e+00> : vector<128xf32>
      %127 = vector.multi_reduction <add>, %126, %cst_31 [0] : vector<16x128xf32> to vector<128xf32>
      %128 = vector.shape_cast %127 : vector<128xf32> to vector<1x128xf32>
      %129 = vector.extract_strided_slice %125 {offsets = [16, 0], sizes = [16, 128], strides = [1, 1]} : vector<32x128xf32> to vector<16x128xf32>
      %cst_32 = arith.constant dense<0.000000e+00> : vector<128xf32>
      %130 = vector.multi_reduction <add>, %129, %cst_32 [0] : vector<16x128xf32> to vector<128xf32>
      %131 = vector.shape_cast %130 : vector<128xf32> to vector<1x128xf32>
      %132 = tpu.concatenate %128, %131 in 0 : vector<1x128xf32>, vector<1x128xf32> -> vector<2x128xf32>
      %cst_33 = arith.constant dense<0.000000e+00> : vector<2x128xf32>
      %133 = tpu.matmul %132, %1, %cst_33 {dimension_numbers = #tpu.dot_dimension_numbers<[1], [0], [0], [1], [0, 0, 1, 1], [], []>} : vector<2x128xf32>, vector<128x128xf32>, vector<2x128xf32> -> vector<2x128xf32>
      %cst_34 = arith.constant 6.250000e-02 : f32
      %134 = vector.broadcast %cst_34 : f32 to vector<2x128xf32>
      %135 = arith.mulf %133, %134 : vector<2x128xf32>
      %cst_35 = arith.constant 9.99999974E-6 : f32
      %136 = vector.broadcast %cst_35 : f32 to vector<2x128xf32>
      %137 = arith.addf %135, %136 : vector<2x128xf32>
      %138 = math.rsqrt %137 : vector<2x128xf32>
      %139 = vector.extract_strided_slice %138 {offsets = [0, 0], sizes = [1, 128], strides = [1, 1]} : vector<2x128xf32> to vector<1x128xf32>
      %140 = vector.shape_cast %139 : vector<1x128xf32> to vector<1x128xf32>
      %141 = vector.broadcast %140 : vector<1x128xf32> to vector<16x128xf32>
      %142 = vector.extract_strided_slice %138 {offsets = [1, 0], sizes = [1, 128], strides = [1, 1]} : vector<2x128xf32> to vector<1x128xf32>
      %143 = vector.shape_cast %142 : vector<1x128xf32> to vector<1x128xf32>
      %144 = vector.broadcast %143 : vector<1x128xf32> to vector<16x128xf32>
      %145 = tpu.concatenate %141, %144 in 0 : vector<16x128xf32>, vector<16x128xf32> -> vector<32x128xf32>
      %146 = arith.mulf %124, %145 : vector<32x128xf32>
      %147 = vector.extract_strided_slice %103 {offsets = [1, 0], sizes = [1, 128], strides = [1, 1]} : vector<3x128xf32> to vector<1x128xf32>
      %148 = vector.broadcast %147 : vector<1x128xf32> to vector<32x128xf32>
      %149 = arith.mulf %146, %148 : vector<32x128xf32>
      %150 = vector.extract_strided_slice %103 {offsets = [2, 0], sizes = [1, 128], strides = [1, 1]} : vector<3x128xf32> to vector<1x128xf32>
      %151 = vector.broadcast %150 : vector<1x128xf32> to vector<32x128xf32>
      %152 = arith.addf %149, %151 : vector<32x128xf32>
      %cst_36 = arith.constant 0.000000e+00 : f32
      %153 = vector.broadcast %cst_36 : f32 to vector<32x128xf32>
      %154 = arith.cmpf oge, %152, %153 : vector<32x128xf32>
      %cst_37 = arith.constant 2.000000e-01 : f32
      %155 = vector.broadcast %cst_37 : f32 to vector<32x128xf32>
      %156 = arith.mulf %155, %152 : vector<32x128xf32>
      %157 = arith.select %154, %152, %156 : vector<32x128xi1>, vector<32x128xf32>
      %c0_38 = arith.constant 0 : index
      %c0_39 = arith.constant 0 : index
      %c0_40 = arith.constant 0 : index
      %158 = vector.load %arg7[%c0_38, %c0_39, %c0_40] : memref<1x32x128xf32, #tpu.memory_space<vmem>>, vector<1x32x128xf32>
      %159 = vector.shape_cast %158 : vector<1x32x128xf32> to vector<32x128xf32>
      %160 = vector.shape_cast %157 : vector<32x128xf32> to vector<1x32x128xf32>
      tpu.vector_store %arg7[%c0_38, %c0_39, %c0_40], %160 {strides = array<i32>} : memref<1x32x128xf32, #tpu.memory_space<vmem>>, vector<1x32x128xf32>,
    } else {
    }
    return
  }
  func.func @transform_0(%arg0: i32, %arg1: i32) -> (i32, i32) {
    %c0_i32 = arith.constant 0 : i32
    %c0_i32_0 = arith.constant 0 : i32
    return %arg1, %c0_i32 : i32, i32
  }
  func.func @transform_1(%arg0: i32, %arg1: i32) -> (i32, i32, i32) {
    %c0_i32 = arith.constant 0 : i32
    %c0_i32_0 = arith.constant 0 : i32
    %c0_i32_1 = arith.constant 0 : i32
    return %arg0, %c0_i32, %c0_i32_0 : i32, i32, i32
  }
  func.func @transform_2(%arg0: i32, %arg1: i32) -> (i32, i32, i32) {
    %c0_i32 = arith.constant 0 : i32
    %c0_i32_0 = arith.constant 0 : i32
    %c0_i32_1 = arith.constant 0 : i32
    return %arg0, %c0_i32, %c0_i32_0 : i32, i32, i32
  }
  func.func @transform_3(%arg0: i32, %arg1: i32) -> (i32, i32, i32, i32) {
    %c0_i32 = arith.constant 0 : i32
    %c0_i32_0 = arith.constant 0 : i32
    %c0_i32_1 = arith.constant 0 : i32
    %c0_i32_2 = arith.constant 0 : i32
    return %arg0, %c0_i32, %c0_i32_0, %c0_i32_1 : i32, i32, i32, i32
  }
  func.func @transform_4(%arg0: i32, %arg1: i32) -> (i32, i32) {
    %c0_i32 = arith.constant 0 : i32
    %c0_i32_0 = arith.constant 0 : i32
    %c0_i32_1 = arith.constant 0 : i32
    return %c0_i32, %c0_i32_0 : i32, i32
  }
  func.func @transform_5(%arg0: i32, %arg1: i32) -> (i32, i32, i32) {
    %c0_i32 = arith.constant 0 : i32
    %c0_i32_0 = arith.constant 0 : i32
    return %arg0, %arg1, %c0_i32 : i32, i32, i32
  }
}

</mosaic_0001>

<llo_original>
// kernel: tile.63
$region0: #{tile.63}
  #allocation0 [shape = 's32[1]{0}', space=sflag, size = 0x4, scoped, tag = 'scoped memory for tile.63']
  %s0 = inlined_call_operand.vmem [shape: f32[8], index: 0, kind: input, shape index: {}]
  %s1 = inlined_call_operand.vmem [shape: f32[16,8], index: 1, kind: output, shape index: {}]
  // Predicated region
  $region2: #{tile.63} parent=0 // pred_check
    _
  $region3: #{tile.63} parent=0 // pred_check_branch
    %3 = sbr.rel (0) target = $region5
  $region4: #{tile.63} parent=0 // pred_region
    _
  $region5: #{tile.63} parent=0 // pred_fallthru
    _
  %v4 = vld [vmem:[%s0] ss:$0 sm:$0xff]
  %5 = vst [vmem:[%s1] sm:$0xff] %v4
  %s6 = scalar_lea.vmem %s1, 8
  %7 = vst [vmem:[%s6] sm:$0xff] %v4

// kernel: tile.72
$region0: #{tile.72}
  %s0 = inlined_call_operand.vmem [shape: f32[16,8], index: 0, kind: input, shape index: {}]
  %s1 = inlined_call_operand.vmem [shape: f32[1,128], index: 1, kind: output, shape index: {}]
  $region1: #{tile.72} parent=0
    #allocation0 [shape = 'u8[4096]{0}', space=vmem, size = 0x1000, scoped, tag = 'scoped mem for output reshape']
    %v2 = vld [vmem:[%s0] sm:$0x1]
    %vm3 = vcmask 64512
    %4 = vst.msk [vmem:[#allocation0] sm:$0x1] %vm3, %v2
    %s5 = scalar_lea.vmem %s0, 15
    %v6 = vld [vmem:[%s5] sm:$0x1]
    %7 = vrot.lane.b32.xlu0 %v6, 120
    %v8 = vpop.permute.xlu0 %7
    %vm9 = vcmask 1048512
    %10 = vst.msk [vmem:[#allocation0] sm:$0x1] %vm9, %v8
    %s11 = scalar_lea.vmem %s0, 14
    %v12 = vld [vmem:[%s11] sm:$0x1]
    %13 = vrot.lane.b32.xlu0 %v12, 112
    %v14 = vpop.permute.xlu0 %13
    %vm15 = vcmask 982912
    %16 = vst.msk [vmem:[#allocation0] sm:$0x1] %vm15, %v14
    %s17 = scalar_lea.vmem %s0, 13
    %v18 = vld [vmem:[%s17] sm:$0x1]
    %19 = vrot.lane.b32.xlu0 %v18, 104
    %v20 = vpop.permute.xlu0 %19
    %vm21 = vcmask 917312
    %22 = vst.msk [vmem:[#allocation0] sm:$0x1] %vm21, %v20
    %s23 = scalar_lea.vmem %s0, 12
    %v24 = vld [vmem:[%s23] sm:$0x1]
    %25 = vrot.lane.b32.xlu0 %v24, 96
    %v26 = vpop.permute.xlu0 %25
    %vm27 = vcmask 851712
    %28 = vst.msk [vmem:[#allocation0] sm:$0x1] %vm27, %v26
    %s29 = scalar_lea.vmem %s0, 11
    %v30 = vld [vmem:[%s29] sm:$0x1]
    %31 = vrot.lane.b32.xlu0 %v30, 88
    %v32 = vpop.permute.xlu0 %31
    %vm33 = vcmask 786112
    %34 = vst.msk [vmem:[#allocation0] sm:$0x1] %vm33, %v32
    %s35 = scalar_lea.vmem %s0, 10
    %v36 = vld [vmem:[%s35] sm:$0x1]
    %37 = vrot.lane.b32.xlu0 %v36, 80
    %v38 = vpop.permute.xlu0 %37
    %vm39 = vcmask 720512
    %40 = vst.msk [vmem:[#allocation0] sm:$0x1] %vm39, %v38
    %s41 = scalar_lea.vmem %s0, 9
    %v42 = vld [vmem:[%s41] sm:$0x1]
    %43 = vrot.lane.b32.xlu0 %v42, 72
    %v44 = vpop.permute.xlu0 %43
    %vm45 = vcmask 654912
    %46 = vst.msk [vmem:[#allocation0] sm:$0x1] %vm45, %v44
    %s47 = scalar_lea.vmem %s0, 8
    %v48 = vld [vmem:[%s47] sm:$0x1]
    %49 = vrot.lane.b32.xlu0 %v48, 64
    %v50 = vpop.permute.xlu0 %49
    %vm51 = vcmask 589312
    %52 = vst.msk [vmem:[#allocation0] sm:$0x1] %vm51, %v50
    %s53 = scalar_lea.vmem %s0, 7
    %v54 = vld [vmem:[%s53] sm:$0x1]
    %55 = vrot.lane.b32.xlu0 %v54, 56
    %v56 = vpop.permute.xlu0 %55
    %vm57 = vcmask 523712
    %58 = vst.msk [vmem:[#allocation0] sm:$0x1] %vm57, %v56
    %s59 = scalar_lea.vmem %s0, 6
    %v60 = vld [vmem:[%s59] sm:$0x1]
    %61 = vrot.lane.b32.xlu0 %v60, 48
    %v62 = vpop.permute.xlu0 %61
    %vm63 = vcmask 458112
    %64 = vst.msk [vmem:[#allocation0] sm:$0x1] %vm63, %v62
    %s65 = scalar_lea.vmem %s0, 5
    %v66 = vld [vmem:[%s65] sm:$0x1]
    %67 = vrot.lane.b32.xlu0 %v66, 40
    %v68 = vpop.permute.xlu0 %67
    %vm69 = vcmask 392512
    %70 = vst.msk [vmem:[#allocation0] sm:$0x1] %vm69, %v68
    %s71 = scalar_lea.vmem %s0, 4
    %v72 = vld [vmem:[%s71] sm:$0x1]
    %73 = vrot.lane.b32.xlu0 %v72, 32
    %v74 = vpop.permute.xlu0 %73
    %vm75 = vcmask 326912
    %76 = vst.msk [vmem:[#allocation0] sm:$0x1] %vm75, %v74
    %s77 = scalar_lea.vmem %s0, 3
    %v78 = vld [vmem:[%s77] sm:$0x1]
    %79 = vrot.lane.b32.xlu0 %v78, 24
    %v80 = vpop.permute.xlu0 %79
    %vm81 = vcmask 261312
    %82 = vst.msk [vmem:[#allocation0] sm:$0x1] %vm81, %v80
    %s83 = scalar_lea.vmem %s0, 2
    %v84 = vld [vmem:[%s83] sm:$0x1]
    %85 = vrot.lane.b32.xlu0 %v84, 16
    %v86 = vpop.permute.xlu0 %85
    %vm87 = vcmask 195712
    %88 = vst.msk [vmem:[#allocation0] sm:$0x1] %vm87, %v86
    %s89 = scalar_lea.vmem %s0, 1
    %v90 = vld [vmem:[%s89] sm:$0x1]
    %91 = vrot.lane.b32.xlu0 %v90, 8
    %v92 = vpop.permute.xlu0 %91
    %vm93 = vcmask 130112
    %94 = vst.msk [vmem:[#allocation0] sm:$0x1] %vm93, %v92
    %s96 = sshllo.u32 0, 1
    %v98 = vld [vmem:[#allocation0] sm:%s96]
    %s99 = sshllo.u32 0, 1
    %100 = vst [vmem:[%s1] sm:%s99] %v98

// kernel: conv_multi_block_pallas.1
$region0: #{conv_multi_block_pallas.1}
  #allocation0 [shape = 'u32[]', space=smem, size = 0x4, offset = 0x4, fixed_abs, tag = 'smem constant byte address 0x4 - core index']
  #allocation1 [shape = 'u32[144,128]{1,0:T(1,128)}', space=vmem, size = 0x12000, scoped, tag = 'internal scratch']
  %s0 = inlined_call_operand.vmem [shape: f32[32,64], index: 0, kind: input, shape index: {}]
  %s1 = inlined_call_operand.vmem [shape: f32[2,192,128], index: 1, kind: input, shape index: {}]
  %s2 = inlined_call_operand.vmem [shape: f32[2,384,128], index: 2, kind: input, shape index: {}]
  %s3 = inlined_call_operand.vmem [shape: f32[2,2,3,128], index: 3, kind: input, shape index: {}]
  %s4 = inlined_call_operand.vmem [shape: f32[128,128], index: 4, kind: input, shape index: {}]
  %s5 = inlined_call_operand.vmem [shape: f32[2,32,128], index: 5, kind: output, shape index: {}]
  %s6 = sld [smem:[#allocation0]]
  $region61: #{conv_multi_block_pallas.1} parent=0
    _
  %s8 = ssub.s32 1, %s6
  %s9 = scalar_select 0, %s8, %s6
  loop: start=0, step=1, limit=4
  $region2: #{conv_multi_block_pallas.1} parent=0 // loop_pre_header
    _
  $region3: #{conv_multi_block_pallas.1} parent=0 // loop_header
    %s11 = sphi 0, %s15
    %p12 = scmp.ge.s32.totalorder %s11, 4
    %s18 = sphi 0, %s30
    %s19 = sphi 0, %s26
    %s20 = sphi 0, %s18
    %s21 = sphi 0, %s19
    %s22 = sphi 0, %s20
    %s23 = sphi 0, %s21
    %s33 = sphi 0, %s35
    %s36 = sphi 0, %s33
    %s37 = sphi 0, %s36
    %s53 = sphi 0, %s37
    %s59 = sphi 0, %s61
    %s62 = sphi 0, %s59
    %s63 = sphi 0, %s62
    %s79 = sphi 0, %s63
    %s85 = sphi 0, %s87
    %s88 = sphi 0, %s85
    %s89 = sphi 0, %s88
    %s105 = sphi 0, %s89
    %s111 = sphi 0, %s113
    %s114 = sphi 0, %s111
    %s115 = sphi 0, %s114
    %s131 = sphi 0, %s115
    %s135 = sphi 0, %s135
    %s137 = sphi 0, %s135
    %s138 = sphi 0, %s137
    %s152 = sphi 0, %s138
    %s160 = sphi 0, %s162
    %s163 = sphi 0, %s160
    %s164 = sphi 0, %s163
    %s180 = sphi 0, %s164
  $region4: #{conv_multi_block_pallas.1} parent=0 // loop_header_branch
    %14 = sbr.rel (%p12) target = $region8
  $region5: #{conv_multi_block_pallas.1} parent=0 // loop_body
    %s16 = ssub.s32 %s11, 1
    %s17 = ssub.s32 %s11, 2
    %s24 = sadd.s32 1, %s19
    %p25 = scmp.ge.s32.totalorder %s24, 1
    %s26 = scalar_select %p25, 0, %s24
    %s27 = sadd.s32 1, %s18
    %s28 = scalar_select %p25, %s27, %s18
    %p29 = scmp.ge.s32.totalorder %s28, 2
    %s30 = scalar_select %p29, 0, %s28
    %s31 = ssub.s32 %s19, %s26
    %p32 = scmp.eq.s32.totalorder %s31, 0
    %s34 = sadd.s32 %s33, 1
    %s35 = scalar_select %p32, %s33, %s34
    %p38 = pneg %p32
    %p39 = scmp.eq.s32.totalorder %s11, 1
    %p40 = por %p38, %p39
    %p41 = scmp.ne.s32.totalorder %s33, %s36
    %p42 = scmp.eq.s32.totalorder %s11, 0
    %p43 = por %p41, %p42
    %p44 = scmp.ne.s32.totalorder %s33, %s36
    %p45 = scmp.eq.s32.totalorder %s16, 1
    %p46 = por %p44, %p45
    %p47 = scmp.ne.s32.totalorder %s36, %s37
    %p48 = scmp.eq.s32.totalorder %s16, 0
    %p49 = por %p47, %p48
    %p50 = scmp.ne.s32.totalorder %s36, %s37
    %p51 = scmp.eq.s32.totalorder %s17, 1
    %p52 = por %p50, %p51
    %p54 = scmp.ne.s32.totalorder %s37, %s53
    %p55 = scmp.eq.s32.totalorder %s17, 0
    %p56 = por %p54, %p55
    %s57 = ssub.s32 %s18, %s30
    %p58 = scmp.eq.s32.totalorder %s57, 0
    %s60 = sadd.s32 %s59, 1
    %s61 = scalar_select %p58, %s59, %s60
    %p64 = pneg %p58
    %p65 = scmp.eq.s32.totalorder %s11, 1
    %p66 = por %p64, %p65
    %p67 = scmp.ne.s32.totalorder %s59, %s62
    %p68 = scmp.eq.s32.totalorder %s11, 0
    %p69 = por %p67, %p68
    %p70 = scmp.ne.s32.totalorder %s59, %s62
    %p71 = scmp.eq.s32.totalorder %s16, 1
    %p72 = por %p70, %p71
    %p73 = scmp.ne.s32.totalorder %s62, %s63
    %p74 = scmp.eq.s32.totalorder %s16, 0
    %p75 = por %p73, %p74
    %p76 = scmp.ne.s32.totalorder %s62, %s63
    %p77 = scmp.eq.s32.totalorder %s17, 1
    %p78 = por %p76, %p77
    %p80 = scmp.ne.s32.totalorder %s63, %s79
    %p81 = scmp.eq.s32.totalorder %s17, 0
    %p82 = por %p80, %p81
    %s83 = ssub.s32 %s18, %s30
    %p84 = scmp.eq.s32.totalorder %s83, 0
    %s86 = sadd.s32 %s85, 1
    %s87 = scalar_select %p84, %s85, %s86
    %p90 = pneg %p84
    %p91 = scmp.eq.s32.totalorder %s11, 1
    %p92 = por %p90, %p91
    %p93 = scmp.ne.s32.totalorder %s85, %s88
    %p94 = scmp.eq.s32.totalorder %s11, 0
    %p95 = por %p93, %p94
    %p96 = scmp.ne.s32.totalorder %s85, %s88
    %p97 = scmp.eq.s32.totalorder %s16, 1
    %p98 = por %p96, %p97
    %p99 = scmp.ne.s32.totalorder %s88, %s89
    %p100 = scmp.eq.s32.totalorder %s16, 0
    %p101 = por %p99, %p100
    %p102 = scmp.ne.s32.totalorder %s88, %s89
    %p103 = scmp.eq.s32.totalorder %s17, 1
    %p104 = por %p102, %p103
    %p106 = scmp.ne.s32.totalorder %s89, %s105
    %p107 = scmp.eq.s32.totalorder %s17, 0
    %p108 = por %p106, %p107
    %s109 = ssub.s32 %s18, %s30
    %p110 = scmp.eq.s32.totalorder %s109, 0
    %s112 = sadd.s32 %s111, 1
    %s113 = scalar_select %p110, %s111, %s112
    %p116 = pneg %p110
    %p117 = scmp.eq.s32.totalorder %s11, 1
    %p118 = por %p116, %p117
    %p119 = scmp.ne.s32.totalorder %s111, %s114
    %p120 = scmp.eq.s32.totalorder %s11, 0
    %p121 = por %p119, %p120
    %p122 = scmp.ne.s32.totalorder %s111, %s114
    %p123 = scmp.eq.s32.totalorder %s16, 1
    %p124 = por %p122, %p123
    %p125 = scmp.ne.s32.totalorder %s114, %s115
    %p126 = scmp.eq.s32.totalorder %s16, 0
    %p127 = por %p125, %p126
    %p128 = scmp.ne.s32.totalorder %s114, %s115
    %p129 = scmp.eq.s32.totalorder %s17, 1
    %p130 = por %p128, %p129
    %p132 = scmp.ne.s32.totalorder %s115, %s131
    %p133 = scmp.eq.s32.totalorder %s17, 0
    %p134 = por %p132, %p133
    %s136 = sadd.s32 %s135, 1
    %p139 = scmp.eq.s32.totalorder %s11, 1
    %p140 = scmp.ne.s32.totalorder %s135, %s137
    %p141 = scmp.eq.s32.totalorder %s11, 0
    %p142 = por %p140, %p141
    %p143 = scmp.ne.s32.totalorder %s135, %s137
    %p144 = scmp.eq.s32.totalorder %s16, 1
    %p145 = por %p143, %p144
    %p146 = scmp.ne.s32.totalorder %s137, %s138
    %p147 = scmp.eq.s32.totalorder %s16, 0
    %p148 = por %p146, %p147
    %p149 = scmp.ne.s32.totalorder %s137, %s138
    %p150 = scmp.eq.s32.totalorder %s17, 1
    %p151 = por %p149, %p150
    %p153 = scmp.ne.s32.totalorder %s138, %s152
    %p154 = scmp.eq.s32.totalorder %s17, 0
    %p155 = por %p153, %p154
    %s156 = ssub.s32 %s18, %s30
    %s157 = ssub.s32 %s19, %s26
    %s158 = sor.u32 %s156, %s157
    %p159 = scmp.eq.s32.totalorder %s158, 0
    %s161 = sadd.s32 %s160, 1
    %s162 = scalar_select %p159, %s160, %s161
    %p165 = pneg %p159
    %p166 = scmp.eq.s32.totalorder %s11, 1
    %p167 = por %p165, %p166
    %p168 = scmp.ne.s32.totalorder %s160, %s163
    %p169 = scmp.eq.s32.totalorder %s11, 0
    %p170 = por %p168, %p169
    %p171 = scmp.ne.s32.totalorder %s160, %s163
    %p172 = scmp.eq.s32.totalorder %s16, 1
    %p173 = por %p171, %p172
    %p174 = scmp.ne.s32.totalorder %s163, %s164
    %p175 = scmp.eq.s32.totalorder %s16, 0
    %p176 = por %p174, %p175
    %p177 = scmp.ne.s32.totalorder %s163, %s164
    %p178 = scmp.eq.s32.totalorder %s17, 1
    %p179 = por %p177, %p178
    %p181 = scmp.ne.s32.totalorder %s164, %s180
    %p182 = scmp.eq.s32.totalorder %s17, 0
    %p183 = por %p181, %p182
    %p184 = scmp.le.s32.totalorder 1, %s11
    %p185 = scmp.lt.s32.totalorder %s11, 3
    %p186 = pnand %p184, %p185
    %p187 = pneg %p186
    // Predicated region
    $region9: #{conv_multi_block_pallas.1} parent=5 // pred_check
      _
    $region10: #{conv_multi_block_pallas.1} parent=5 // pred_check_branch
      %189 = sbr.rel (%p186) target = $region12
    $region11: #{conv_multi_block_pallas.1} parent=5 // pred_region
      %s190 = ssub.s32 %s11, 1
      // Predicated region
      $region13: #{conv_multi_block_pallas.1} parent=11 // pred_check
        %p191 = pneg %p49
      $region14: #{conv_multi_block_pallas.1} parent=11 // pred_check_branch
        %193 = sbr.rel (%p191) target = $region16
      $region15: #{conv_multi_block_pallas.1} parent=11 // pred_region
        %s194 = smul.u32 4, %s21
        %p195 = scmp.lt.s32.totalorder %s194, 3
        %s196 = scalar_select %p195, %s194, 3
        %s197 = smul.addr %s196, 8
        %s198 = scalar_lea.vmem %s0, %s197
        %s199 = smul.u32 4, %s21
      $region16: #{conv_multi_block_pallas.1} parent=11 // pred_fallthru
        _
      // Predicated region
      $region17: #{conv_multi_block_pallas.1} parent=11 // pred_check
        %p200 = pneg %p148
      $region18: #{conv_multi_block_pallas.1} parent=11 // pred_check_branch
        %202 = sbr.rel (%p200) target = $region20
      $region19: #{conv_multi_block_pallas.1} parent=11 // pred_region
        _
      $region20: #{conv_multi_block_pallas.1} parent=11 // pred_fallthru
        _
    $region12: #{conv_multi_block_pallas.1} parent=5 // pred_fallthru
      _
    %p203 = scmp.lt.s32.totalorder %s11, 2
    // Predicated region
    $region21: #{conv_multi_block_pallas.1} parent=5 // pred_check
      %p204 = pneg %p203
    $region22: #{conv_multi_block_pallas.1} parent=5 // pred_check_branch
      %206 = sbr.rel (%p204) target = $region24
    $region23: #{conv_multi_block_pallas.1} parent=5 // pred_region
      // Predicated region
      $region25: #{conv_multi_block_pallas.1} parent=23 // pred_check
        %p207 = pneg %p69
      $region26: #{conv_multi_block_pallas.1} parent=23 // pred_check_branch
        %209 = sbr.rel (%p207) target = $region28
      $region27: #{conv_multi_block_pallas.1} parent=23 // pred_region
        %p210 = scmp.lt.s32.totalorder %s18, 1
        %s211 = scalar_select %p210, %s18, 1
        %s212 = smul.addr %s211, 24
        %s213 = smul.addr %s212, 8
        %s214 = scalar_lea.vmem %s1, %s213
      $region28: #{conv_multi_block_pallas.1} parent=23 // pred_fallthru
        _
      // Predicated region
      $region29: #{conv_multi_block_pallas.1} parent=23 // pred_check
        %p215 = pneg %p95
      $region30: #{conv_multi_block_pallas.1} parent=23 // pred_check_branch
        %217 = sbr.rel (%p215) target = $region32
      $region31: #{conv_multi_block_pallas.1} parent=23 // pred_region
        %p218 = scmp.lt.s32.totalorder %s18, 1
        %s219 = scalar_select %p218, %s18, 1
        %s220 = smul.addr %s219, 48
        %s221 = smul.addr %s220, 8
        %s222 = scalar_lea.vmem %s2, %s221
      $region32: #{conv_multi_block_pallas.1} parent=23 // pred_fallthru
        _
      // Predicated region
      $region33: #{conv_multi_block_pallas.1} parent=23 // pred_check
        %p223 = pneg %p121
      $region34: #{conv_multi_block_pallas.1} parent=23 // pred_check_branch
        %225 = sbr.rel (%p223) target = $region36
      $region35: #{conv_multi_block_pallas.1} parent=23 // pred_region
        %p226 = scmp.lt.s32.totalorder %s18, 1
        %s227 = scalar_select %p226, %s18, 1
        %s228 = smul.addr %s227, 2
        %s229 = smul.addr %s228, 4
        %s230 = scalar_lea.vmem %s3, %s229
      $region36: #{conv_multi_block_pallas.1} parent=23 // pred_fallthru
        _
    $region24: #{conv_multi_block_pallas.1} parent=5 // pred_fallthru
      _
    %p231 = scmp.le.s32.totalorder 1, %s11
    %p232 = scmp.lt.s32.totalorder %s11, 3
    %p233 = pnand %p231, %p232
    %p234 = pneg %p233
    // Predicated region
    $region37: #{conv_multi_block_pallas.1} parent=5 // pred_check
      _
    $region38: #{conv_multi_block_pallas.1} parent=5 // pred_check_branch
      %236 = sbr.rel (%p233) target = $region40
    $region39: #{conv_multi_block_pallas.1} parent=5 // pred_region
      %s237 = ssub.s32 %s11, 1
      %s238 = smul.u32 4, %s21
      %p239 = scmp.lt.s32.totalorder %s238, 3
      %s240 = scalar_select %p239, %s238, 3
      %s241 = smul.addr %s240, 8
      %s242 = scalar_lea.vmem %s0, %s241
      %p243 = pneg %p49
      %p244 = pneg %p46
      %p245 = scmp.lt.s32.totalorder %s20, 1
      %s246 = scalar_select %p245, %s20, 1
      %s247 = smul.addr %s246, 24
      %s248 = smul.addr %s247, 8
      %s249 = scalar_lea.vmem %s1, %s248
      %p250 = pneg %p75
      %p251 = pneg %p72
      %p252 = scmp.lt.s32.totalorder %s20, 1
      %s253 = scalar_select %p252, %s20, 1
      %s254 = smul.addr %s253, 48
      %s255 = smul.addr %s254, 8
      %s256 = scalar_lea.vmem %s2, %s255
      %p257 = pneg %p101
      %p258 = pneg %p98
      %p259 = scmp.lt.s32.totalorder %s20, 1
      %s260 = scalar_select %p259, %s20, 1
      %s261 = smul.addr %s260, 2
      %s262 = smul.addr %s261, 4
      %s263 = scalar_lea.vmem %s3, %s262
      %p264 = pneg %p127
      %p265 = pneg %p124
      %p266 = pneg %p148
      %p267 = pneg %p145
      %p268 = pneg %p176
      %p269 = pneg %p173
      %s270 = smul.u32 4, %s21
      %p271 = scmp.lt.s32.totalorder %s20, 1
      %s272 = scalar_select %p271, %s20, 1
      %p273 = scmp.lt.s32.totalorder %s270, 3
      %s274 = scalar_select %p273, %s270, 3
      %s275 = smul.addr %s272, 4
      %s276 = sadd.s32 %s274, %s275
      %s277 = smul.addr %s276, 8
      %s278 = scalar_lea.vmem %s5, %s277
      %s279 = smul.u32 4, %s21
      %p280 = scmp.lt.s32.totalorder %s279, 3
      %s281 = scalar_select %p280, %s279, 3
      %s282 = smul.addr %s281, 8
      %s283 = scalar_lea.vmem %s0, %s282
      %s284 = smul.u32 4, %s21
      %p285 = scmp.lt.s32.totalorder %s20, 1
      %s286 = scalar_select %p285, %s20, 1
      %s287 = smul.addr %s286, 24
      %s288 = smul.addr %s287, 8
      %s289 = scalar_lea.vmem %s1, %s288
      %p290 = scmp.lt.s32.totalorder %s20, 1
      %s291 = scalar_select %p290, %s20, 1
      %s292 = smul.addr %s291, 48
      %s293 = smul.addr %s292, 8
      %s294 = scalar_lea.vmem %s2, %s293
      %p295 = scmp.lt.s32.totalorder %s20, 1
      %s296 = scalar_select %p295, %s20, 1
      %s297 = smul.addr %s296, 2
      %s298 = smul.addr %s297, 4
      %s299 = scalar_lea.vmem %s3, %s298
      %s300 = smul.u32 4, %s21
      %p301 = scmp.lt.s32.totalorder %s20, 1
      %s302 = scalar_select %p301, %s20, 1
      %p303 = scmp.lt.s32.totalorder %s300, 3
      %s304 = scalar_select %p303, %s300, 3
      %s305 = smul.addr %s302, 4
      %s306 = sadd.s32 %s304, %s305
      %s307 = smul.addr %s306, 8
      %s308 = scalar_lea.vmem %s5, %s307
      %s309 = smul.u32 4, %s21
      %v310 = vld [vmem:[%s283] sm:$0xff]
      %v311 = vld [vmem:[%s283 + $0x8] sm:$0xff]
      %v312 = vld [vmem:[%s283 + $0x10] sm:$0xff]
      %v313 = vld [vmem:[%s283 + $0x18] sm:$0xff]
      %v314 = vld [vmem:[%s4] sm:$0xff]
      %v315 = vld [vmem:[%s4 + $0x8] sm:$0xff]
      %v316 = vld [vmem:[%s4 + $0x10] sm:$0xff]
      %v317 = vld [vmem:[%s4 + $0x18] sm:$0xff]
      %v318 = vld [vmem:[%s4 + $0x20] sm:$0xff]
      %v319 = vld [vmem:[%s4 + $0x28] sm:$0xff]
      %v320 = vld [vmem:[%s4 + $0x30] sm:$0xff]
      %v321 = vld [vmem:[%s4 + $0x38] sm:$0xff]
      %v322 = vld [vmem:[%s4 + $0x40] sm:$0xff]
      %v323 = vld [vmem:[%s4 + $0x48] sm:$0xff]
      %v324 = vld [vmem:[%s4 + $0x50] sm:$0xff]
      %v325 = vld [vmem:[%s4 + $0x58] sm:$0xff]
      %v326 = vld [vmem:[%s4 + $0x60] sm:$0xff]
      %v327 = vld [vmem:[%s4 + $0x68] sm:$0xff]
      %v328 = vld [vmem:[%s4 + $0x70] sm:$0xff]
      %v329 = vld [vmem:[%s4 + $0x78] sm:$0xff]
      %p330 = scmp.eq.s32.totalorder %s20, 0
      // Predicated region
      $region41: #{conv_multi_block_pallas.1} parent=39 // pred_check
        %p331 = pneg %p330
      $region42: #{conv_multi_block_pallas.1} parent=39 // pred_check_branch
        %333 = sbr.rel (%p331) target = $region44
      $region43: #{conv_multi_block_pallas.1} parent=39 // pred_region
        %v334 = vld [vmem:[%s289] sm:$0xff]
        %v335 = vld [vmem:[%s289 + $0x8] sm:$0xff]
        %v336 = vld [vmem:[%s289 + $0x10] sm:$0xff]
        %v337 = vld [vmem:[%s289 + $0x18] sm:$0xff]
        %v338 = vld [vmem:[%s289 + $0x20] sm:$0xff]
        %v339 = vld [vmem:[%s289 + $0x28] sm:$0xff]
        %v340 = vld [vmem:[%s289 + $0x30] sm:$0xff]
        %v341 = vld [vmem:[%s289 + $0x38] sm:$0xff]
        %v342 = vld [vmem:[%s289 + $0x40] sm:$0xff]
        %v343 = vld [vmem:[%s289 + $0x48] sm:$0xff]
        %v344 = vld [vmem:[%s289 + $0x50] sm:$0xff]
        %v345 = vld [vmem:[%s289 + $0x58] sm:$0xff]
        %v346 = vld [vmem:[%s289 + $0x60] sm:$0xff]
        %v347 = vld [vmem:[%s289 + $0x68] sm:$0xff]
        %v348 = vld [vmem:[%s289 + $0x70] sm:$0xff]
        %v349 = vld [vmem:[%s289 + $0x78] sm:$0xff]
        %v350 = vld [vmem:[%s289 + $0x80] sm:$0xff]
        %v351 = vld [vmem:[%s289 + $0x88] sm:$0xff]
        %v352 = vld [vmem:[%s289 + $0x90] sm:$0xff]
        %v353 = vld [vmem:[%s289 + $0x98] sm:$0xff]
        %v354 = vld [vmem:[%s289 + $0xa0] sm:$0xff]
        %v355 = vld [vmem:[%s289 + $0xa8] sm:$0xff]
        %v356 = vld [vmem:[%s289 + $0xb0] sm:$0xff]
        %v357 = vld [vmem:[%s289 + $0xb8] sm:$0xff]
        %v358 = vld [vmem:[%s294] sm:$0xff]
        %v359 = vld [vmem:[%s294 + $0x8] sm:$0xff]
        %v360 = vld [vmem:[%s294 + $0x10] sm:$0xff]
        %v361 = vld [vmem:[%s294 + $0x18] sm:$0xff]
        %v362 = vld [vmem:[%s294 + $0x20] sm:$0xff]
        %v363 = vld [vmem:[%s294 + $0x28] sm:$0xff]
        %v364 = vld [vmem:[%s294 + $0x30] sm:$0xff]
        %v365 = vld [vmem:[%s294 + $0x38] sm:$0xff]
        %v366 = vld [vmem:[%s294 + $0x40] sm:$0xff]
        %v367 = vld [vmem:[%s294 + $0x48] sm:$0xff]
        %v368 = vld [vmem:[%s294 + $0x50] sm:$0xff]
        %v369 = vld [vmem:[%s294 + $0x58] sm:$0xff]
        %v370 = vld [vmem:[%s294 + $0x60] sm:$0xff]
        %v371 = vld [vmem:[%s294 + $0x68] sm:$0xff]
        %v372 = vld [vmem:[%s294 + $0x70] sm:$0xff]
        %v373 = vld [vmem:[%s294 + $0x78] sm:$0xff]
        %v374 = vld [vmem:[%s294 + $0x80] sm:$0xff]
        %v375 = vld [vmem:[%s294 + $0x88] sm:$0xff]
        %v376 = vld [vmem:[%s294 + $0x90] sm:$0xff]
        %v377 = vld [vmem:[%s294 + $0x98] sm:$0xff]
        %v378 = vld [vmem:[%s294 + $0xa0] sm:$0xff]
        %v379 = vld [vmem:[%s294 + $0xa8] sm:$0xff]
        %v380 = vld [vmem:[%s294 + $0xb0] sm:$0xff]
        %v381 = vld [vmem:[%s294 + $0xb8] sm:$0xff]
        %v382 = vld [vmem:[%s294 + $0xc0] sm:$0xff]
        %v383 = vld [vmem:[%s294 + $0xc8] sm:$0xff]
        %v384 = vld [vmem:[%s294 + $0xd0] sm:$0xff]
        %v385 = vld [vmem:[%s294 + $0xd8] sm:$0xff]
        %v386 = vld [vmem:[%s294 + $0xe0] sm:$0xff]
        %v387 = vld [vmem:[%s294 + $0xe8] sm:$0xff]
        %v388 = vld [vmem:[%s294 + $0xf0] sm:$0xff]
        %v389 = vld [vmem:[%s294 + $0xf8] sm:$0xff]
        %v390 = vld [vmem:[%s294 + $0x100] sm:$0xff]
        %v391 = vld [vmem:[%s294 + $0x108] sm:$0xff]
        %v392 = vld [vmem:[%s294 + $0x110] sm:$0xff]
        %v393 = vld [vmem:[%s294 + $0x118] sm:$0xff]
        %v394 = vld [vmem:[%s294 + $0x120] sm:$0xff]
        %v395 = vld [vmem:[%s294 + $0x128] sm:$0xff]
        %v396 = vld [vmem:[%s294 + $0x130] sm:$0xff]
        %v397 = vld [vmem:[%s294 + $0x138] sm:$0xff]
        %v398 = vld [vmem:[%s294 + $0x140] sm:$0xff]
        %v399 = vld [vmem:[%s294 + $0x148] sm:$0xff]
        %v400 = vld [vmem:[%s294 + $0x150] sm:$0xff]
        %v401 = vld [vmem:[%s294 + $0x158] sm:$0xff]
        %v402 = vld [vmem:[%s294 + $0x160] sm:$0xff]
        %v403 = vld [vmem:[%s294 + $0x168] sm:$0xff]
        %v404 = vld [vmem:[%s294 + $0x170] sm:$0xff]
        %v405 = vld [vmem:[%s294 + $0x178] sm:$0xff]
        %v406 = vld [vmem:[%s299] sm:$0x7]
        %v407 = vld [vmem:[%s299 + $0x4] sm:$0x7]
        %v409 = vrot.slane %v310, 1
        %vm412 = vcmask 1040384
        %v413 = vrot.slane %v310, 7
        %v414 = vrot.slane %v311, 7
        %v415 = vsel %vm412, %v413, %v414
        %v419 = vrot.slane %v312, 1
        %v422 = vrot.slane %v312, 7
        %v423 = vrot.slane %v313, 7
        %v424 = vsel %vm412, %v422, %v423
        %v427 = vsel %vm412, %v409, %v413
        %v428 = vsel %vm412, %v419, %v422
        %vm429 = vcmask 1046528
        %v430 = vrot.slane %v311, 1
        %v431 = vsel %vm429, %v409, %v430
        %v434 = vrot.slane %v313, 1
        %v435 = vsel %vm429, %v419, %v434
        %v438 = vsel %vm429, %v430, %v414
        %v439 = vsel %vm429, %v434, %v423
        %440 = vrot.lane.b32.xlu0 %v310, 64
        %v441 = vpop.permute.xlu0 %440
        %442 = vrot.lane.b32.xlu0 %v311, 64
        %v443 = vpop.permute.xlu0 %442
        %444 = vrot.lane.b32.xlu0 %v312, 64
        %v445 = vpop.permute.xlu0 %444
        %446 = vrot.lane.b32.xlu0 %v313, 64
        %v447 = vpop.permute.xlu0 %446
        %vm452 = vcmask 523264
        %v453 = vsel %vm452, %v427, %v441
        %v454 = vsel %vm452, %v415, %v443
        %v455 = vsel %vm452, %v428, %v445
        %v456 = vsel %vm452, %v424, %v447
        %v457 = vlaneseq
        %v458 = vshrl.u32 %v457, 7
        %v459 = vsub.s32 0, %v458
        %v460 = vrot.slane %v406, %v459
        %v461 = vsel %vm452, %v431, 0
        %v464 = vsel %vm452, %v438, 0
        %v466 = vsel %vm452, %v435, 0
        %v469 = vsel %vm452, %v439, 0
        %471 = vmatprep.subr.mxu0 0.0
        %472 = vmatpush1.msra.mxu0 %v334
        %473 = vmatprep.subr.mxu0 0.0
        %474 = vmatpush1.msra.mxu0 %v335
        %475 = vmatprep.subr.mxu0 0.0
        %476 = vmatpush1.msra.mxu0 %v336
        %477 = vmatprep.subr.mxu0 0.0
        %478 = vmatpush1.msra.mxu0 %v337
        %479 = vmatprep.subr.mxu0 0.0
        %480 = vmatpush1.msra.mxu0 %v338
        %481 = vmatprep.subr.mxu0 0.0
        %482 = vmatpush1.msra.mxu0 %v339
        %483 = vmatprep.subr.mxu0 0.0
        %484 = vmatpush1.msra.mxu0 %v340
        %485 = vmatprep.subr.mxu0 0.0
        %486 = vmatpush1.msra.mxu0 %v341
        %487 = vmatprep.subr.mxu0 0.0
        %488 = vmatpush1.msra.mxu0 %v342
        %489 = vmatprep.subr.mxu0 0.0
        %490 = vmatpush1.msra.mxu0 %v343
        %491 = vmatprep.subr.mxu0 0.0
        %492 = vmatpush1.msra.mxu0 %v344
        %493 = vmatprep.subr.mxu0 0.0
        %494 = vmatpush1.msra.mxu0 %v345
        %495 = vmatprep.subr.mxu0 0.0
        %496 = vmatpush1.msra.mxu0 %v346
        %497 = vmatprep.subr.mxu0 0.0
        %498 = vmatpush1.msra.mxu0 %v347
        %499 = vmatprep.subr.mxu0 0.0
        %500 = vmatpush1.msra.mxu0 %v348
        %501 = vmatprep.subr.mxu0 0.0
        %502 = vmatpush1.msra.mxu0 %v349
        %503 = vmatprep.subr.mxu0 0.0
        %504 = vmatpush1.msra.mxu0 %v350
        %505 = vmatprep.subr.mxu0 0.0
        %506 = vmatpush1.msra.mxu0 %v351
        %507 = vmatprep.subr.mxu0 0.0
        %508 = vmatpush1.msra.mxu0 %v352
        %509 = vmatprep.subr.mxu0 0.0
        %510 = vmatpush1.msra.mxu0 %v353
        %511 = vmatprep.subr.mxu0 0.0
        %512 = vmatpush1.msra.mxu0 %v354
        %513 = vmatprep.subr.mxu0 0.0
        %514 = vmatpush1.msra.mxu0 %v355
        %515 = vmatprep.subr.mxu0 0.0
        %516 = vmatpush1.msra.mxu0 %v356
        %517 = vmatprep.subr.mxu0 0.0
        %518 = vmatpush1.msra.mxu0 %v357
        %519 = vmatprep.subr.mxu0 0.0
        %520 = vmatpush1.msra.mxu0 0.0
        %521 = vmatprep.subr.mxu0 0.0
        %522 = vmatpush1.msra.mxu0 0.0
        %523 = vmatprep.subr.mxu0 0.0
        %524 = vmatpush1.msra.mxu0 0.0
        %525 = vmatprep.subr.mxu0 0.0
        %526 = vmatpush1.msra.mxu0 0.0
        %527 = vmatprep.subr.mxu0 0.0
        %528 = vmatpush1.msra.mxu0 0.0
        %529 = vmatprep.subr.mxu0 0.0
        %530 = vmatpush1.msra.mxu0 0.0
        %531 = vmatprep.subr.mxu0 0.0
        %532 = vmatpush1.msra.mxu0 0.0
        %533 = vmatprep.subr.mxu0 0.0
        %534 = vmatpush1.msra.mxu0 0.0
        %535 = vmatprep.mubr.f32.mxu0 %v461
        %536 = vmatmul.mubr.f32.gmra.mrb[0].mxu0 %v453
        %v537 = vpop.f32.mrb[0].mxu0
        %v538 = vadd.f32 %v460, %v537
        %v539 = vpop.f32.mrb[0].mxu0
        %540 = vmatprep.mubr.f32.mxu0 %v464
        %541 = vmatmul.mubr.f32.gmra.mrb[0].mxu0 %v454
        %v542 = vpop.f32.mrb[0].mxu0
        %v543 = vadd.f32 %v460, %v542
        %v544 = vpop.f32.mrb[0].mxu0
        %545 = vmatprep.mubr.f32.mxu0 %v466
        %546 = vmatmul.mubr.f32.gmra.mrb[0].mxu0 %v455
        %v547 = vpop.f32.mrb[0].mxu0
        %v548 = vadd.f32 %v460, %v547
        %v549 = vpop.f32.mrb[0].mxu0
        %550 = vmatprep.mubr.f32.mxu0 %v469
        %551 = vmatmul.mubr.f32.gmra.mrb[0].mxu0 %v456
        %v552 = vpop.f32.mrb[0].mxu0
        %v553 = vadd.f32 %v460, %v552
        %v554 = vpop.f32.mrb[0].mxu0
        %555 = vdwg.mxu0
        %v556 = vadd.f32 %v538, %v543
        %v557 = vrot.slane %v556, 4
        %v558 = vadd.f32 %v556, %v557
        %v559 = vrot.slane %v558, 2
        %v560 = vadd.f32 %v558, %v559
        %v561 = vrot.slane %v560, 1
        %v562 = vadd.f32 %v560, %v561
        %v563 = vadd.f32 %v548, %v553
        %v564 = vrot.slane %v563, 4
        %v565 = vadd.f32 %v563, %v564
        %v566 = vrot.slane %v565, 2
        %v567 = vadd.f32 %v565, %v566
        %v568 = vrot.slane %v567, 1
        %v569 = vadd.f32 %v567, %v568
        %v570 = vsel %vm412, %v562, %v569
        %571 = vmatprep.subr.mxu0 0.0
        %572 = vmatpush1.msra.mxu0 %v314
        %573 = vmatprep.subr.mxu0 0.0
        %574 = vmatpush1.msra.mxu0 %v315
        %575 = vmatprep.subr.mxu0 0.0
        %576 = vmatpush1.msra.mxu0 %v316
        %577 = vmatprep.subr.mxu0 0.0
        %578 = vmatpush1.msra.mxu0 %v317
        %579 = vmatprep.subr.mxu0 0.0
        %580 = vmatpush1.msra.mxu0 %v318
        %581 = vmatprep.subr.mxu0 0.0
        %582 = vmatpush1.msra.mxu0 %v319
        %583 = vmatprep.subr.mxu0 0.0
        %584 = vmatpush1.msra.mxu0 %v320
        %585 = vmatprep.subr.mxu0 0.0
        %586 = vmatpush1.msra.mxu0 %v321
        %587 = vmatprep.subr.mxu0 0.0
        %588 = vmatpush1.msra.mxu0 %v322
        %589 = vmatprep.subr.mxu0 0.0
        %590 = vmatpush1.msra.mxu0 %v323
        %591 = vmatprep.subr.mxu0 0.0
        %592 = vmatpush1.msra.mxu0 %v324
        %593 = vmatprep.subr.mxu0 0.0
        %594 = vmatpush1.msra.mxu0 %v325
        %595 = vmatprep.subr.mxu0 0.0
        %596 = vmatpush1.msra.mxu0 %v326
        %597 = vmatprep.subr.mxu0 0.0
        %598 = vmatpush1.msra.mxu0 %v327
        %599 = vmatprep.subr.mxu0 0.0
        %600 = vmatpush1.msra.mxu0 %v328
        %601 = vmatprep.subr.mxu0 0.0
        %602 = vmatpush1.msra.mxu0 %v329
        %603 = vmatprep.subr.mxu0 0.0
        %604 = vmatpush1.msra.mxu0 0.0
        %605 = vmatprep.subr.mxu0 0.0
        %606 = vmatpush1.msra.mxu0 0.0
        %607 = vmatprep.subr.mxu0 0.0
        %608 = vmatpush1.msra.mxu0 0.0
        %609 = vmatprep.subr.mxu0 0.0
        %610 = vmatpush1.msra.mxu0 0.0
        %611 = vmatprep.subr.mxu0 0.0
        %612 = vmatpush1.msra.mxu0 0.0
        %613 = vmatprep.subr.mxu0 0.0
        %614 = vmatpush1.msra.mxu0 0.0
        %615 = vmatprep.subr.mxu0 0.0
        %616 = vmatpush1.msra.mxu0 0.0
        %617 = vmatprep.subr.mxu0 0.0
        %618 = vmatpush1.msra.mxu0 0.0
        %619 = vmatprep.subr.mxu0 0.0
        %620 = vmatpush1.msra.mxu0 0.0
        %621 = vmatprep.subr.mxu0 0.0
        %622 = vmatpush1.msra.mxu0 0.0
        %623 = vmatprep.subr.mxu0 0.0
        %624 = vmatpush1.msra.mxu0 0.0
        %625 = vmatprep.subr.mxu0 0.0
        %626 = vmatpush1.msra.mxu0 0.0
        %627 = vmatprep.subr.mxu0 0.0
        %628 = vmatpush1.msra.mxu0 0.0
        %629 = vmatprep.subr.mxu0 0.0
        %630 = vmatpush1.msra.mxu0 0.0
        %631 = vmatprep.subr.mxu0 0.0
        %632 = vmatpush1.msra.mxu0 0.0
        %633 = vmatprep.subr.mxu0 0.0
        %634 = vmatpush1.msra.mxu0 0.0
        %635 = vmatprep.mubr.f32.mxu0 0.0
        %636 = vmatmul.mubr.f32.gmra.mrb[0].mxu0 %v570
        %v637 = vpop.f32.mrb[0].mxu0
        %v638 = vadd.f32 0.0, %v637
        %v639 = vpop.f32.mrb[0].mxu0
        %640 = vdwg.mxu0
        %v641 = vmul.f32 %v638, 0.0625
        %v642 = vlaneseq
        %v643 = vshrl.u32 %v642, 7
        %v644 = vsub.s32 0, %v643
        %v645 = vrot.slane %v641, %v644
        %v646 = vlaneseq
        %v647 = vshrl.u32 %v646, 7
        %v648 = vsub.s32 1, %v647
        %v649 = vrot.slane %v641, %v648
        %v650 = vsub.f32 %v538, %v645
        %v651 = vsub.f32 %v543, %v645
        %v652 = vsub.f32 %v548, %v649
        %v653 = vsub.f32 %v553, %v649
        %v654 = vmul.f32 %v650, %v650
        %v655 = vmul.f32 %v651, %v651
        %v656 = vmul.f32 %v652, %v652
        %v657 = vmul.f32 %v653, %v653
        %v658 = vadd.f32 %v654, %v655
        %v659 = vrot.slane %v658, 4
        %v660 = vadd.f32 %v658, %v659
        %v661 = vrot.slane %v660, 2
        %v662 = vadd.f32 %v660, %v661
        %v663 = vrot.slane %v662, 1
        %v664 = vadd.f32 %v662, %v663
        %v665 = vadd.f32 %v656, %v657
        %v666 = vrot.slane %v665, 4
        %v667 = vadd.f32 %v665, %v666
        %v668 = vrot.slane %v667, 2
        %v669 = vadd.f32 %v667, %v668
        %v670 = vrot.slane %v669, 1
        %v671 = vadd.f32 %v669, %v670
        %v672 = vsel %vm412, %v664, %v671
        %673 = vmatprep.subr.mxu0 0.0
        %674 = vmatpush1.msra.mxu0 %v314
        %675 = vmatprep.subr.mxu0 0.0
        %676 = vmatpush1.msra.mxu0 %v315
        %677 = vmatprep.subr.mxu0 0.0
        %678 = vmatpush1.msra.mxu0 %v316
        %679 = vmatprep.subr.mxu0 0.0
        %680 = vmatpush1.msra.mxu0 %v317
        %681 = vmatprep.subr.mxu0 0.0
        %682 = vmatpush1.msra.mxu0 %v318
        %683 = vmatprep.subr.mxu0 0.0
        %684 = vmatpush1.msra.mxu0 %v319
        %685 = vmatprep.subr.mxu0 0.0
        %686 = vmatpush1.msra.mxu0 %v320
        %687 = vmatprep.subr.mxu0 0.0
        %688 = vmatpush1.msra.mxu0 %v321
        %689 = vmatprep.subr.mxu0 0.0
        %690 = vmatpush1.msra.mxu0 %v322
        %691 = vmatprep.subr.mxu0 0.0
        %692 = vmatpush1.msra.mxu0 %v323
        %693 = vmatprep.subr.mxu0 0.0
        %694 = vmatpush1.msra.mxu0 %v324
        %695 = vmatprep.subr.mxu0 0.0
        %696 = vmatpush1.msra.mxu0 %v325
        %697 = vmatprep.subr.mxu0 0.0
        %698 = vmatpush1.msra.mxu0 %v326
        %699 = vmatprep.subr.mxu0 0.0
        %700 = vmatpush1.msra.mxu0 %v327
        %701 = vmatprep.subr.mxu0 0.0
        %702 = vmatpush1.msra.mxu0 %v328
        %703 = vmatprep.subr.mxu0 0.0
        %704 = vmatpush1.msra.mxu0 %v329
        %705 = vmatprep.subr.mxu0 0.0
        %706 = vmatpush1.msra.mxu0 0.0
        %707 = vmatprep.subr.mxu0 0.0
        %708 = vmatpush1.msra.mxu0 0.0
        %709 = vmatprep.subr.mxu0 0.0
        %710 = vmatpush1.msra.mxu0 0.0
        %711 = vmatprep.subr.mxu0 0.0
        %712 = vmatpush1.msra.mxu0 0.0
        %713 = vmatprep.subr.mxu0 0.0
        %714 = vmatpush1.msra.mxu0 0.0
        %715 = vmatprep.subr.mxu0 0.0
        %716 = vmatpush1.msra.mxu0 0.0
        %717 = vmatprep.subr.mxu0 0.0
        %718 = vmatpush1.msra.mxu0 0.0
        %719 = vmatprep.subr.mxu0 0.0
        %720 = vmatpush1.msra.mxu0 0.0
        %721 = vmatprep.subr.mxu0 0.0
        %722 = vmatpush1.msra.mxu0 0.0
        %723 = vmatprep.subr.mxu0 0.0
        %724 = vmatpush1.msra.mxu0 0.0
        %725 = vmatprep.subr.mxu0 0.0
        %726 = vmatpush1.msra.mxu0 0.0
        %727 = vmatprep.subr.mxu0 0.0
        %728 = vmatpush1.msra.mxu0 0.0
        %729 = vmatprep.subr.mxu0 0.0
        %730 = vmatpush1.msra.mxu0 0.0
        %731 = vmatprep.subr.mxu0 0.0
        %732 = vmatpush1.msra.mxu0 0.0
        %733 = vmatprep.subr.mxu0 0.0
        %734 = vmatpush1.msra.mxu0 0.0
        %735 = vmatprep.subr.mxu0 0.0
        %736 = vmatpush1.msra.mxu0 0.0
        %737 = vmatprep.mubr.f32.mxu0 0.0
        %738 = vmatmul.mubr.f32.gmra.mrb[0].mxu0 %v672
        %v739 = vpop.f32.mrb[0].mxu0
        %v740 = vadd.f32 0.0, %v739
        %v741 = vpop.f32.mrb[0].mxu0
        %742 = vdwg.mxu0
        %v743 = vmul.f32 %v740, 0.0625
        %v744 = vadd.f32 %v743, 1e-05
        %v745 = vrsqrt.pop %v744
        %v746 = vlaneseq
        %v747 = vshrl.u32 %v746, 7
        %v748 = vsub.s32 0, %v747
        %v749 = vrot.slane %v745, %v748
        %v750 = vlaneseq
        %v751 = vshrl.u32 %v750, 7
        %v752 = vsub.s32 1, %v751
        %v753 = vrot.slane %v745, %v752
        %v754 = vmul.f32 %v650, %v749
        %v755 = vmul.f32 %v651, %v749
        %v756 = vmul.f32 %v652, %v753
        %v757 = vmul.f32 %v653, %v753
        %v758 = vlaneseq
        %v759 = vshrl.u32 %v758, 7
        %v760 = vsub.s32 1, %v759
        %v761 = vrot.slane %v406, %v760
        %v762 = vmul.f32 %v754, %v761
        %v763 = vmul.f32 %v755, %v761
        %v764 = vmul.f32 %v756, %v761
        %v765 = vmul.f32 %v757, %v761
        %v766 = vlaneseq
        %v767 = vshrl.u32 %v766, 7
        %v768 = vsub.s32 2, %v767
        %v769 = vrot.slane %v406, %v768
        %v770 = vadd.f32 %v762, %v769
        %v771 = vadd.f32 %v763, %v769
        %v772 = vadd.f32 %v764, %v769
        %v773 = vadd.f32 %v765, %v769
        %vm774 = vcmp.ge.f32.partialorder %v770, 0.0
        %vm775 = vcmp.ge.f32.partialorder %v771, 0.0
        %vm776 = vcmp.ge.f32.partialorder %v772, 0.0
        %vm777 = vcmp.ge.f32.partialorder %v773, 0.0
        %v778 = vmul.f32 %v770, 0.2
        %v779 = vmul.f32 %v771, 0.2
        %v780 = vmul.f32 %v772, 0.2
        %v781 = vmul.f32 %v773, 0.2
        %v782 = vsel %vm774, %v770, %v778
        %v783 = vsel %vm775, %v771, %v779
        %v784 = vsel %vm776, %v772, %v780
        %v785 = vsel %vm777, %v773, %v781
        %v787 = vrot.slane %v782, 1
        %v790 = vrot.slane %v782, 7
        %v791 = vrot.slane %v783, 7
        %v792 = vsel %vm412, %v790, %v791
        %v796 = vrot.slane %v784, 1
        %v799 = vrot.slane %v784, 7
        %v800 = vrot.slane %v785, 7
        %v801 = vsel %vm412, %v799, %v800
        %v804 = vsel %vm412, %v787, %v790
        %v805 = vsel %vm412, %v796, %v799
        %v806 = vrot.slane %v783, 1
        %v807 = vsel %vm429, %v787, %v806
        %v811 = vrot.slane %v785, 1
        %v812 = vsel %vm429, %v796, %v811
        %v816 = vsel %vm429, %v806, %v791
        %v817 = vsel %vm429, %v811, %v800
        %v818 = vlaneseq
        %v819 = vshrl.u32 %v818, 7
        %v820 = vsub.s32 0, %v819
        %v821 = vrot.slane %v407, %v820
        %822 = vmatprep.subr.mxu0 0.0
        %823 = vmatpush1.msra.mxu0 %v358
        %824 = vmatprep.subr.mxu0 0.0
        %825 = vmatpush1.msra.mxu0 %v359
        %826 = vmatprep.subr.mxu0 0.0
        %827 = vmatpush1.msra.mxu0 %v360
        %828 = vmatprep.subr.mxu0 0.0
        %829 = vmatpush1.msra.mxu0 %v361
        %830 = vmatprep.subr.mxu0 0.0
        %831 = vmatpush1.msra.mxu0 %v362
        %832 = vmatprep.subr.mxu0 0.0
        %833 = vmatpush1.msra.mxu0 %v363
        %834 = vmatprep.subr.mxu0 0.0
        %835 = vmatpush1.msra.mxu0 %v364
        %836 = vmatprep.subr.mxu0 0.0
        %837 = vmatpush1.msra.mxu0 %v365
        %838 = vmatprep.subr.mxu0 0.0
        %839 = vmatpush1.msra.mxu0 %v366
        %840 = vmatprep.subr.mxu0 0.0
        %841 = vmatpush1.msra.mxu0 %v367
        %842 = vmatprep.subr.mxu0 0.0
        %843 = vmatpush1.msra.mxu0 %v368
        %844 = vmatprep.subr.mxu0 0.0
        %845 = vmatpush1.msra.mxu0 %v369
        %846 = vmatprep.subr.mxu0 0.0
        %847 = vmatpush1.msra.mxu0 %v370
        %848 = vmatprep.subr.mxu0 0.0
        %849 = vmatpush1.msra.mxu0 %v371
        %850 = vmatprep.subr.mxu0 0.0
        %851 = vmatpush1.msra.mxu0 %v372
        %852 = vmatprep.subr.mxu0 0.0
        %853 = vmatpush1.msra.mxu0 %v373
        %854 = vmatprep.subr.mxu0 0.0
        %855 = vmatpush1.msra.mxu0 %v374
        %856 = vmatprep.subr.mxu0 0.0
        %857 = vmatpush1.msra.mxu0 %v375
        %858 = vmatprep.subr.mxu0 0.0
        %859 = vmatpush1.msra.mxu0 %v376
        %860 = vmatprep.subr.mxu0 0.0
        %861 = vmatpush1.msra.mxu0 %v377
        %862 = vmatprep.subr.mxu0 0.0
        %863 = vmatpush1.msra.mxu0 %v378
        %864 = vmatprep.subr.mxu0 0.0
        %865 = vmatpush1.msra.mxu0 %v379
        %866 = vmatprep.subr.mxu0 0.0
        %867 = vmatpush1.msra.mxu0 %v380
        %868 = vmatprep.subr.mxu0 0.0
        %869 = vmatpush1.msra.mxu0 %v381
        %870 = vmatprep.subr.mxu0 0.0
        %871 = vmatpush1.msra.mxu0 %v382
        %872 = vmatprep.subr.mxu0 0.0
        %873 = vmatpush1.msra.mxu0 %v383
        %874 = vmatprep.subr.mxu0 0.0
        %875 = vmatpush1.msra.mxu0 %v384
        %876 = vmatprep.subr.mxu0 0.0
        %877 = vmatpush1.msra.mxu0 %v385
        %878 = vmatprep.subr.mxu0 0.0
        %879 = vmatpush1.msra.mxu0 %v386
        %880 = vmatprep.subr.mxu0 0.0
        %881 = vmatpush1.msra.mxu0 %v387
        %882 = vmatprep.subr.mxu0 0.0
        %883 = vmatpush1.msra.mxu0 %v388
        %884 = vmatprep.subr.mxu0 0.0
        %885 = vmatpush1.msra.mxu0 %v389
        %886 = vmatprep.mubr.f32.mxu0 %v782
        %887 = vmatmul.mubr.f32.gmra.mrb[0].mxu0 %v804
        %v888 = vpop.f32.mrb[0].mxu0
        %v889 = vadd.f32 %v821, %v888
        %v890 = vpop.f32.mrb[0].mxu0
        %891 = vmatprep.mubr.f32.mxu0 %v783
        %892 = vmatmul.mubr.f32.gmra.mrb[0].mxu0 %v792
        %v893 = vpop.f32.mrb[0].mxu0
        %v894 = vadd.f32 %v821, %v893
        %v895 = vpop.f32.mrb[0].mxu0
        %896 = vmatprep.mubr.f32.mxu0 %v784
        %897 = vmatmul.mubr.f32.gmra.mrb[0].mxu0 %v805
        %v898 = vpop.f32.mrb[0].mxu0
        %v899 = vadd.f32 %v821, %v898
        %v900 = vpop.f32.mrb[0].mxu0
        %901 = vmatprep.mubr.f32.mxu0 %v785
        %902 = vmatmul.mubr.f32.gmra.mrb[0].mxu0 %v801
        %v903 = vpop.f32.mrb[0].mxu0
        %v904 = vadd.f32 %v821, %v903
        %v905 = vpop.f32.mrb[0].mxu0
        %906 = vdwg.mxu0
        %907 = vmatprep.subr.mxu0 0.0
        %908 = vmatpush1.msra.mxu0 %v390
        %909 = vmatprep.subr.mxu0 0.0
        %910 = vmatpush1.msra.mxu0 %v391
        %911 = vmatprep.subr.mxu0 0.0
        %912 = vmatpush1.msra.mxu0 %v392
        %913 = vmatprep.subr.mxu0 0.0
        %914 = vmatpush1.msra.mxu0 %v393
        %915 = vmatprep.subr.mxu0 0.0
        %916 = vmatpush1.msra.mxu0 %v394
        %917 = vmatprep.subr.mxu0 0.0
        %918 = vmatpush1.msra.mxu0 %v395
        %919 = vmatprep.subr.mxu0 0.0
        %920 = vmatpush1.msra.mxu0 %v396
        %921 = vmatprep.subr.mxu0 0.0
        %922 = vmatpush1.msra.mxu0 %v397
        %923 = vmatprep.subr.mxu0 0.0
        %924 = vmatpush1.msra.mxu0 %v398
        %925 = vmatprep.subr.mxu0 0.0
        %926 = vmatpush1.msra.mxu0 %v399
        %927 = vmatprep.subr.mxu0 0.0
        %928 = vmatpush1.msra.mxu0 %v400
        %929 = vmatprep.subr.mxu0 0.0
        %930 = vmatpush1.msra.mxu0 %v401
        %931 = vmatprep.subr.mxu0 0.0
        %932 = vmatpush1.msra.mxu0 %v402
        %933 = vmatprep.subr.mxu0 0.0
        %934 = vmatpush1.msra.mxu0 %v403
        %935 = vmatprep.subr.mxu0 0.0
        %936 = vmatpush1.msra.mxu0 %v404
        %937 = vmatprep.subr.mxu0 0.0
        %938 = vmatpush1.msra.mxu0 %v405
        %939 = vmatprep.subr.mxu0 0.0
        %940 = vmatpush1.msra.mxu0 0.0
        %941 = vmatprep.subr.mxu0 0.0
        %942 = vmatpush1.msra.mxu0 0.0
        %943 = vmatprep.subr.mxu0 0.0
        %944 = vmatpush1.msra.mxu0 0.0
        %945 = vmatprep.subr.mxu0 0.0
        %946 = vmatpush1.msra.mxu0 0.0
        %947 = vmatprep.subr.mxu0 0.0
        %948 = vmatpush1.msra.mxu0 0.0
        %949 = vmatprep.subr.mxu0 0.0
        %950 = vmatpush1.msra.mxu0 0.0
        %951 = vmatprep.subr.mxu0 0.0
        %952 = vmatpush1.msra.mxu0 0.0
        %953 = vmatprep.subr.mxu0 0.0
        %954 = vmatpush1.msra.mxu0 0.0
        %955 = vmatprep.subr.mxu0 0.0
        %956 = vmatpush1.msra.mxu0 0.0
        %957 = vmatprep.subr.mxu0 0.0
        %958 = vmatpush1.msra.mxu0 0.0
        %959 = vmatprep.subr.mxu0 0.0
        %960 = vmatpush1.msra.mxu0 0.0
        %961 = vmatprep.subr.mxu0 0.0
        %962 = vmatpush1.msra.mxu0 0.0
        %963 = vmatprep.subr.mxu0 0.0
        %964 = vmatpush1.msra.mxu0 0.0
        %965 = vmatprep.subr.mxu0 0.0
        %966 = vmatpush1.msra.mxu0 0.0
        %967 = vmatprep.subr.mxu0 0.0
        %968 = vmatpush1.msra.mxu0 0.0
        %969 = vmatprep.subr.mxu0 0.0
        %970 = vmatpush1.msra.mxu0 0.0
        %971 = vmatprep.mubr.f32.mxu0 0.0
        %972 = vmatmul.mubr.f32.gmra.mrb[0].mxu0 %v807
        %v973 = vpop.f32.mrb[0].mxu0
        %v974 = vadd.f32 %v889, %v973
        %v975 = vpop.f32.mrb[0].mxu0
        %976 = vmatprep.mubr.f32.mxu0 0.0
        %977 = vmatmul.mubr.f32.gmra.mrb[0].mxu0 %v816
        %v978 = vpop.f32.mrb[0].mxu0
        %v979 = vadd.f32 %v894, %v978
        %v980 = vpop.f32.mrb[0].mxu0
        %981 = vmatprep.mubr.f32.mxu0 0.0
        %982 = vmatmul.mubr.f32.gmra.mrb[0].mxu0 %v812
        %v983 = vpop.f32.mrb[0].mxu0
        %v984 = vadd.f32 %v899, %v983
        %v985 = vpop.f32.mrb[0].mxu0
        %986 = vmatprep.mubr.f32.mxu0 0.0
        %987 = vmatmul.mubr.f32.gmra.mrb[0].mxu0 %v817
        %v988 = vpop.f32.mrb[0].mxu0
        %v989 = vadd.f32 %v904, %v988
        %v990 = vpop.f32.mrb[0].mxu0
        %991 = vdwg.mxu0
        %v992 = vadd.f32 %v974, %v979
        %v993 = vrot.slane %v992, 4
        %v994 = vadd.f32 %v992, %v993
        %v995 = vrot.slane %v994, 2
        %v996 = vadd.f32 %v994, %v995
        %v997 = vrot.slane %v996, 1
        %v998 = vadd.f32 %v996, %v997
        %v999 = vadd.f32 %v984, %v989
        %v1000 = vrot.slane %v999, 4
        %v1001 = vadd.f32 %v999, %v1000
        %v1002 = vrot.slane %v1001, 2
        %v1003 = vadd.f32 %v1001, %v1002
        %v1004 = vrot.slane %v1003, 1
        %v1005 = vadd.f32 %v1003, %v1004
        %v1006 = vsel %vm412, %v998, %v1005
        %1007 = vmatprep.subr.mxu0 0.0
        %1008 = vmatpush1.msra.mxu0 %v314
        %1009 = vmatprep.subr.mxu0 0.0
        %1010 = vmatpush1.msra.mxu0 %v315
        %1011 = vmatprep.subr.mxu0 0.0
        %1012 = vmatpush1.msra.mxu0 %v316
        %1013 = vmatprep.subr.mxu0 0.0
        %1014 = vmatpush1.msra.mxu0 %v317
        %1015 = vmatprep.subr.mxu0 0.0
        %1016 = vmatpush1.msra.mxu0 %v318
        %1017 = vmatprep.subr.mxu0 0.0
        %1018 = vmatpush1.msra.mxu0 %v319
        %1019 = vmatprep.subr.mxu0 0.0
        %1020 = vmatpush1.msra.mxu0 %v320
        %1021 = vmatprep.subr.mxu0 0.0
        %1022 = vmatpush1.msra.mxu0 %v321
        %1023 = vmatprep.subr.mxu0 0.0
        %1024 = vmatpush1.msra.mxu0 %v322
        %1025 = vmatprep.subr.mxu0 0.0
        %1026 = vmatpush1.msra.mxu0 %v323
        %1027 = vmatprep.subr.mxu0 0.0
        %1028 = vmatpush1.msra.mxu0 %v324
        %1029 = vmatprep.subr.mxu0 0.0
        %1030 = vmatpush1.msra.mxu0 %v325
        %1031 = vmatprep.subr.mxu0 0.0
        %1032 = vmatpush1.msra.mxu0 %v326
        %1033 = vmatprep.subr.mxu0 0.0
        %1034 = vmatpush1.msra.mxu0 %v327
        %1035 = vmatprep.subr.mxu0 0.0
        %1036 = vmatpush1.msra.mxu0 %v328
        %1037 = vmatprep.subr.mxu0 0.0
        %1038 = vmatpush1.msra.mxu0 %v329
        %1039 = vmatprep.subr.mxu0 0.0
        %1040 = vmatpush1.msra.mxu0 0.0
        %1041 = vmatprep.subr.mxu0 0.0
        %1042 = vmatpush1.msra.mxu0 0.0
        %1043 = vmatprep.subr.mxu0 0.0
        %1044 = vmatpush1.msra.mxu0 0.0
        %1045 = vmatprep.subr.mxu0 0.0
        %1046 = vmatpush1.msra.mxu0 0.0
        %1047 = vmatprep.subr.mxu0 0.0
        %1048 = vmatpush1.msra.mxu0 0.0
        %1049 = vmatprep.subr.mxu0 0.0
        %1050 = vmatpush1.msra.mxu0 0.0
        %1051 = vmatprep.subr.mxu0 0.0
        %1052 = vmatpush1.msra.mxu0 0.0
        %1053 = vmatprep.subr.mxu0 0.0
        %1054 = vmatpush1.msra.mxu0 0.0
        %1055 = vmatprep.subr.mxu0 0.0
        %1056 = vmatpush1.msra.mxu0 0.0
        %1057 = vmatprep.subr.mxu0 0.0
        %1058 = vmatpush1.msra.mxu0 0.0
        %1059 = vmatprep.subr.mxu0 0.0
        %1060 = vmatpush1.msra.mxu0 0.0
        %1061 = vmatprep.subr.mxu0 0.0
        %1062 = vmatpush1.msra.mxu0 0.0
        %1063 = vmatprep.subr.mxu0 0.0
        %1064 = vmatpush1.msra.mxu0 0.0
        %1065 = vmatprep.subr.mxu0 0.0
        %1066 = vmatpush1.msra.mxu0 0.0
        %1067 = vmatprep.subr.mxu0 0.0
        %1068 = vmatpush1.msra.mxu0 0.0
        %1069 = vmatprep.subr.mxu0 0.0
        %1070 = vmatpush1.msra.mxu0 0.0
        %1071 = vmatprep.mubr.f32.mxu0 0.0
        %1072 = vmatmul.mubr.f32.gmra.mrb[0].mxu0 %v1006
        %v1073 = vpop.f32.mrb[0].mxu0
        %v1074 = vadd.f32 0.0, %v1073
        %v1075 = vpop.f32.mrb[0].mxu0
        %1076 = vdwg.mxu0
        %v1077 = vmul.f32 %v1074, 0.0625
        %v1078 = vlaneseq
        %v1079 = vshrl.u32 %v1078, 7
        %v1080 = vsub.s32 0, %v1079
        %v1081 = vrot.slane %v1077, %v1080
        %v1082 = vlaneseq
        %v1083 = vshrl.u32 %v1082, 7
        %v1084 = vsub.s32 1, %v1083
        %v1085 = vrot.slane %v1077, %v1084
        %v1086 = vsub.f32 %v974, %v1081
        %v1087 = vsub.f32 %v979, %v1081
        %v1088 = vsub.f32 %v984, %v1085
        %v1089 = vsub.f32 %v989, %v1085
        %v1090 = vmul.f32 %v1086, %v1086
        %v1091 = vmul.f32 %v1087, %v1087
        %v1092 = vmul.f32 %v1088, %v1088
        %v1093 = vmul.f32 %v1089, %v1089
        %v1094 = vadd.f32 %v1090, %v1091
        %v1095 = vrot.slane %v1094, 4
        %v1096 = vadd.f32 %v1094, %v1095
        %v1097 = vrot.slane %v1096, 2
        %v1098 = vadd.f32 %v1096, %v1097
        %v1099 = vrot.slane %v1098, 1
        %v1100 = vadd.f32 %v1098, %v1099
        %v1101 = vadd.f32 %v1092, %v1093
        %v1102 = vrot.slane %v1101, 4
        %v1103 = vadd.f32 %v1101, %v1102
        %v1104 = vrot.slane %v1103, 2
        %v1105 = vadd.f32 %v1103, %v1104
        %v1106 = vrot.slane %v1105, 1
        %v1107 = vadd.f32 %v1105, %v1106
        %v1108 = vsel %vm412, %v1100, %v1107
        %1109 = vmatprep.subr.mxu0 0.0
        %1110 = vmatpush1.msra.mxu0 %v314
        %1111 = vmatprep.subr.mxu0 0.0
        %1112 = vmatpush1.msra.mxu0 %v315
        %1113 = vmatprep.subr.mxu0 0.0
        %1114 = vmatpush1.msra.mxu0 %v316
        %1115 = vmatprep.subr.mxu0 0.0
        %1116 = vmatpush1.msra.mxu0 %v317
        %1117 = vmatprep.subr.mxu0 0.0
        %1118 = vmatpush1.msra.mxu0 %v318
        %1119 = vmatprep.subr.mxu0 0.0
        %1120 = vmatpush1.msra.mxu0 %v319
        %1121 = vmatprep.subr.mxu0 0.0
        %1122 = vmatpush1.msra.mxu0 %v320
        %1123 = vmatprep.subr.mxu0 0.0
        %1124 = vmatpush1.msra.mxu0 %v321
        %1125 = vmatprep.subr.mxu0 0.0
        %1126 = vmatpush1.msra.mxu0 %v322
        %1127 = vmatprep.subr.mxu0 0.0
        %1128 = vmatpush1.msra.mxu0 %v323
        %1129 = vmatprep.subr.mxu0 0.0
        %1130 = vmatpush1.msra.mxu0 %v324
        %1131 = vmatprep.subr.mxu0 0.0
        %1132 = vmatpush1.msra.mxu0 %v325
        %1133 = vmatprep.subr.mxu0 0.0
        %1134 = vmatpush1.msra.mxu0 %v326
        %1135 = vmatprep.subr.mxu0 0.0
        %1136 = vmatpush1.msra.mxu0 %v327
        %1137 = vmatprep.subr.mxu0 0.0
        %1138 = vmatpush1.msra.mxu0 %v328
        %1139 = vmatprep.subr.mxu0 0.0
        %1140 = vmatpush1.msra.mxu0 %v329
        %1141 = vmatprep.subr.mxu0 0.0
        %1142 = vmatpush1.msra.mxu0 0.0
        %1143 = vmatprep.subr.mxu0 0.0
        %1144 = vmatpush1.msra.mxu0 0.0
        %1145 = vmatprep.subr.mxu0 0.0
        %1146 = vmatpush1.msra.mxu0 0.0
        %1147 = vmatprep.subr.mxu0 0.0
        %1148 = vmatpush1.msra.mxu0 0.0
        %1149 = vmatprep.subr.mxu0 0.0
        %1150 = vmatpush1.msra.mxu0 0.0
        %1151 = vmatprep.subr.mxu0 0.0
        %1152 = vmatpush1.msra.mxu0 0.0
        %1153 = vmatprep.subr.mxu0 0.0
        %1154 = vmatpush1.msra.mxu0 0.0
        %1155 = vmatprep.subr.mxu0 0.0
        %1156 = vmatpush1.msra.mxu0 0.0
        %1157 = vmatprep.subr.mxu0 0.0
        %1158 = vmatpush1.msra.mxu0 0.0
        %1159 = vmatprep.subr.mxu0 0.0
        %1160 = vmatpush1.msra.mxu0 0.0
        %1161 = vmatprep.subr.mxu0 0.0
        %1162 = vmatpush1.msra.mxu0 0.0
        %1163 = vmatprep.subr.mxu0 0.0
        %1164 = vmatpush1.msra.mxu0 0.0
        %1165 = vmatprep.subr.mxu0 0.0
        %1166 = vmatpush1.msra.mxu0 0.0
        %1167 = vmatprep.subr.mxu0 0.0
        %1168 = vmatpush1.msra.mxu0 0.0
        %1169 = vmatprep.subr.mxu0 0.0
        %1170 = vmatpush1.msra.mxu0 0.0
        %1171 = vmatprep.subr.mxu0 0.0
        %1172 = vmatpush1.msra.mxu0 0.0
        %1173 = vmatprep.mubr.f32.mxu0 0.0
        %1174 = vmatmul.mubr.f32.gmra.mrb[0].mxu0 %v1108
        %v1175 = vpop.f32.mrb[0].mxu0
        %v1176 = vadd.f32 0.0, %v1175
        %v1177 = vpop.f32.mrb[0].mxu0
        %1178 = vdwg.mxu0
        %v1179 = vmul.f32 %v1176, 0.0625
        %v1180 = vadd.f32 %v1179, 1e-05
        %v1181 = vrsqrt.pop %v1180
        %v1182 = vlaneseq
        %v1183 = vshrl.u32 %v1182, 7
        %v1184 = vsub.s32 0, %v1183
        %v1185 = vrot.slane %v1181, %v1184
        %v1186 = vlaneseq
        %v1187 = vshrl.u32 %v1186, 7
        %v1188 = vsub.s32 1, %v1187
        %v1189 = vrot.slane %v1181, %v1188
        %v1190 = vmul.f32 %v1086, %v1185
        %v1191 = vmul.f32 %v1087, %v1185
        %v1192 = vmul.f32 %v1088, %v1189
        %v1193 = vmul.f32 %v1089, %v1189
        %v1194 = vlaneseq
        %v1195 = vshrl.u32 %v1194, 7
        %v1196 = vsub.s32 1, %v1195
        %v1197 = vrot.slane %v407, %v1196
        %v1198 = vmul.f32 %v1190, %v1197
        %v1199 = vmul.f32 %v1191, %v1197
        %v1200 = vmul.f32 %v1192, %v1197
        %v1201 = vmul.f32 %v1193, %v1197
        %v1202 = vlaneseq
        %v1203 = vshrl.u32 %v1202, 7
        %v1204 = vsub.s32 2, %v1203
        %v1205 = vrot.slane %v407, %v1204
        %v1206 = vadd.f32 %v1198, %v1205
        %v1207 = vadd.f32 %v1199, %v1205
        %v1208 = vadd.f32 %v1200, %v1205
        %v1209 = vadd.f32 %v1201, %v1205
        %vm1210 = vcmp.ge.f32.partialorder %v1206, 0.0
        %vm1211 = vcmp.ge.f32.partialorder %v1207, 0.0
        %vm1212 = vcmp.ge.f32.partialorder %v1208, 0.0
        %vm1213 = vcmp.ge.f32.partialorder %v1209, 0.0
        %v1214 = vmul.f32 %v1206, 0.2
        %v1215 = vmul.f32 %v1207, 0.2
        %v1216 = vmul.f32 %v1208, 0.2
        %v1217 = vmul.f32 %v1209, 0.2
        %v1218 = vsel %vm1210, %v1206, %v1214
        %v1219 = vsel %vm1211, %v1207, %v1215
        %v1220 = vsel %vm1212, %v1208, %v1216
        %v1221 = vsel %vm1213, %v1209, %v1217
        %1222 = vst [vmem:[%s308] sm:$0xff] %v1218
        %1223 = vst [vmem:[%s308 + $0x8] sm:$0xff] %v1219
        %1224 = vst [vmem:[%s308 + $0x10] sm:$0xff] %v1220
        %1225 = vst [vmem:[%s308 + $0x18] sm:$0xff] %v1221
      $region44: #{conv_multi_block_pallas.1} parent=39 // pred_fallthru
        _
      %p1226 = scmp.eq.s32.totalorder %s20, 1
      // Predicated region
      $region45: #{conv_multi_block_pallas.1} parent=39 // pred_check
        %p1227 = pneg %p1226
      $region46: #{conv_multi_block_pallas.1} parent=39 // pred_check_branch
        %1229 = sbr.rel (%p1227) target = $region48
      $region47: #{conv_multi_block_pallas.1} parent=39 // pred_region
        %v1230 = vld [vmem:[%s289] sm:$0xff]
        %v1231 = vld [vmem:[%s289 + $0x8] sm:$0xff]
        %v1232 = vld [vmem:[%s289 + $0x10] sm:$0xff]
        %v1233 = vld [vmem:[%s289 + $0x18] sm:$0xff]
        %v1234 = vld [vmem:[%s289 + $0x20] sm:$0xff]
        %v1235 = vld [vmem:[%s289 + $0x28] sm:$0xff]
        %v1236 = vld [vmem:[%s289 + $0x30] sm:$0xff]
        %v1237 = vld [vmem:[%s289 + $0x38] sm:$0xff]
        %v1238 = vld [vmem:[%s289 + $0x40] sm:$0xff]
        %v1239 = vld [vmem:[%s289 + $0x48] sm:$0xff]
        %v1240 = vld [vmem:[%s289 + $0x50] sm:$0xff]
        %v1241 = vld [vmem:[%s289 + $0x58] sm:$0xff]
        %v1242 = vld [vmem:[%s289 + $0x60] sm:$0xff]
        %v1243 = vld [vmem:[%s289 + $0x68] sm:$0xff]
        %v1244 = vld [vmem:[%s289 + $0x70] sm:$0xff]
        %v1245 = vld [vmem:[%s289 + $0x78] sm:$0xff]
        %v1246 = vld [vmem:[%s289 + $0x80] sm:$0xff]
        %v1247 = vld [vmem:[%s289 + $0x88] sm:$0xff]
        %v1248 = vld [vmem:[%s289 + $0x90] sm:$0xff]
        %v1249 = vld [vmem:[%s289 + $0x98] sm:$0xff]
        %v1250 = vld [vmem:[%s289 + $0xa0] sm:$0xff]
        %v1251 = vld [vmem:[%s289 + $0xa8] sm:$0xff]
        %v1252 = vld [vmem:[%s289 + $0xb0] sm:$0xff]
        %v1253 = vld [vmem:[%s289 + $0xb8] sm:$0xff]
        %v1254 = vld [vmem:[%s294] sm:$0xff]
        %v1255 = vld [vmem:[%s294 + $0x8] sm:$0xff]
        %v1256 = vld [vmem:[%s294 + $0x10] sm:$0xff]
        %v1257 = vld [vmem:[%s294 + $0x18] sm:$0xff]
        %v1258 = vld [vmem:[%s294 + $0x20] sm:$0xff]
        %v1259 = vld [vmem:[%s294 + $0x28] sm:$0xff]
        %v1260 = vld [vmem:[%s294 + $0x30] sm:$0xff]
        %v1261 = vld [vmem:[%s294 + $0x38] sm:$0xff]
        %v1262 = vld [vmem:[%s294 + $0x40] sm:$0xff]
        %v1263 = vld [vmem:[%s294 + $0x48] sm:$0xff]
        %v1264 = vld [vmem:[%s294 + $0x50] sm:$0xff]
        %v1265 = vld [vmem:[%s294 + $0x58] sm:$0xff]
        %v1266 = vld [vmem:[%s294 + $0x60] sm:$0xff]
        %v1267 = vld [vmem:[%s294 + $0x68] sm:$0xff]
        %v1268 = vld [vmem:[%s294 + $0x70] sm:$0xff]
        %v1269 = vld [vmem:[%s294 + $0x78] sm:$0xff]
        %v1270 = vld [vmem:[%s294 + $0x80] sm:$0xff]
        %v1271 = vld [vmem:[%s294 + $0x88] sm:$0xff]
        %v1272 = vld [vmem:[%s294 + $0x90] sm:$0xff]
        %v1273 = vld [vmem:[%s294 + $0x98] sm:$0xff]
        %v1274 = vld [vmem:[%s294 + $0xa0] sm:$0xff]
        %v1275 = vld [vmem:[%s294 + $0xa8] sm:$0xff]
        %v1276 = vld [vmem:[%s294 + $0xb0] sm:$0xff]
        %v1277 = vld [vmem:[%s294 + $0xb8] sm:$0xff]
        %v1278 = vld [vmem:[%s294 + $0xc0] sm:$0xff]
        %v1279 = vld [vmem:[%s294 + $0xc8] sm:$0xff]
        %v1280 = vld [vmem:[%s294 + $0xd0] sm:$0xff]
        %v1281 = vld [vmem:[%s294 + $0xd8] sm:$0xff]
        %v1282 = vld [vmem:[%s294 + $0xe0] sm:$0xff]
        %v1283 = vld [vmem:[%s294 + $0xe8] sm:$0xff]
        %v1284 = vld [vmem:[%s294 + $0xf0] sm:$0xff]
        %v1285 = vld [vmem:[%s294 + $0xf8] sm:$0xff]
        %v1286 = vld [vmem:[%s294 + $0x100] sm:$0xff]
        %v1287 = vld [vmem:[%s294 + $0x108] sm:$0xff]
        %v1288 = vld [vmem:[%s294 + $0x110] sm:$0xff]
        %v1289 = vld [vmem:[%s294 + $0x118] sm:$0xff]
        %v1290 = vld [vmem:[%s294 + $0x120] sm:$0xff]
        %v1291 = vld [vmem:[%s294 + $0x128] sm:$0xff]
        %v1292 = vld [vmem:[%s294 + $0x130] sm:$0xff]
        %v1293 = vld [vmem:[%s294 + $0x138] sm:$0xff]
        %v1294 = vld [vmem:[%s294 + $0x140] sm:$0xff]
        %v1295 = vld [vmem:[%s294 + $0x148] sm:$0xff]
        %v1296 = vld [vmem:[%s294 + $0x150] sm:$0xff]
        %v1297 = vld [vmem:[%s294 + $0x158] sm:$0xff]
        %v1298 = vld [vmem:[%s294 + $0x160] sm:$0xff]
        %v1299 = vld [vmem:[%s294 + $0x168] sm:$0xff]
        %v1300 = vld [vmem:[%s294 + $0x170] sm:$0xff]
        %v1301 = vld [vmem:[%s294 + $0x178] sm:$0xff]
        %v1302 = vld [vmem:[%s299] sm:$0x7]
        %v1303 = vld [vmem:[%s299 + $0x4] sm:$0x7]
        %v1305 = vrot.slane %v310, 2
        %vm1308 = vcmask 1041408
        %v1309 = vrot.slane %v310, 6
        %v1310 = vrot.slane %v311, 6
        %v1311 = vsel %vm1308, %v1309, %v1310
        %v1315 = vrot.slane %v312, 2
        %v1318 = vrot.slane %v312, 6
        %v1319 = vrot.slane %v313, 6
        %v1320 = vsel %vm1308, %v1318, %v1319
        %vm1323 = vcmask 1040384
        %v1324 = vsel %vm1323, %v1305, %v310
        %v1325 = vsel %vm1308, %v1324, %v1309
        %v1326 = vsel %vm1323, %v1315, %v312
        %v1327 = vsel %vm1308, %v1326, %v1318
        %vm1328 = vcmask 1045504
        %v1329 = vrot.slane %v311, 2
        %v1330 = vsel %vm1328, %v1305, %v1329
        %v1333 = vrot.slane %v313, 2
        %v1334 = vsel %vm1328, %v1315, %v1333
        %v1337 = vsel %vm1328, %v1329, %v311
        %vm1338 = vcmask 1046528
        %v1339 = vsel %vm1338, %v1337, %v1310
        %v1340 = vsel %vm1328, %v1333, %v313
        %v1341 = vsel %vm1338, %v1340, %v1319
        %1342 = vrot.lane.b32.xlu0 %v310, 64
        %v1343 = vpop.permute.xlu0 %1342
        %1344 = vrot.lane.b32.xlu0 %v311, 64
        %v1345 = vpop.permute.xlu0 %1344
        %1346 = vrot.lane.b32.xlu0 %v312, 64
        %v1347 = vpop.permute.xlu0 %1346
        %1348 = vrot.lane.b32.xlu0 %v313, 64
        %v1349 = vpop.permute.xlu0 %1348
        %vm1354 = vcmask 523264
        %v1355 = vsel %vm1354, %v1325, %v1343
        %v1356 = vsel %vm1354, %v1311, %v1345
        %v1357 = vsel %vm1354, %v1327, %v1347
        %v1358 = vsel %vm1354, %v1320, %v1349
        %v1359 = vlaneseq
        %v1360 = vshrl.u32 %v1359, 7
        %v1361 = vsub.s32 0, %v1360
        %v1362 = vrot.slane %v1302, %v1361
        %v1363 = vsel %vm1354, %v1330, 0
        %v1366 = vsel %vm1354, %v1339, 0
        %v1368 = vsel %vm1354, %v1334, 0
        %v1371 = vsel %vm1354, %v1341, 0
        %1373 = vmatprep.subr.mxu0 0.0
        %1374 = vmatpush1.msra.mxu0 %v1230
        %1375 = vmatprep.subr.mxu0 0.0
        %1376 = vmatpush1.msra.mxu0 %v1231
        %1377 = vmatprep.subr.mxu0 0.0
        %1378 = vmatpush1.msra.mxu0 %v1232
        %1379 = vmatprep.subr.mxu0 0.0
        %1380 = vmatpush1.msra.mxu0 %v1233
        %1381 = vmatprep.subr.mxu0 0.0
        %1382 = vmatpush1.msra.mxu0 %v1234
        %1383 = vmatprep.subr.mxu0 0.0
        %1384 = vmatpush1.msra.mxu0 %v1235
        %1385 = vmatprep.subr.mxu0 0.0
        %1386 = vmatpush1.msra.mxu0 %v1236
        %1387 = vmatprep.subr.mxu0 0.0
        %1388 = vmatpush1.msra.mxu0 %v1237
        %1389 = vmatprep.subr.mxu0 0.0
        %1390 = vmatpush1.msra.mxu0 %v1238
        %1391 = vmatprep.subr.mxu0 0.0
        %1392 = vmatpush1.msra.mxu0 %v1239
        %1393 = vmatprep.subr.mxu0 0.0
        %1394 = vmatpush1.msra.mxu0 %v1240
        %1395 = vmatprep.subr.mxu0 0.0
        %1396 = vmatpush1.msra.mxu0 %v1241
        %1397 = vmatprep.subr.mxu0 0.0
        %1398 = vmatpush1.msra.mxu0 %v1242
        %1399 = vmatprep.subr.mxu0 0.0
        %1400 = vmatpush1.msra.mxu0 %v1243
        %1401 = vmatprep.subr.mxu0 0.0
        %1402 = vmatpush1.msra.mxu0 %v1244
        %1403 = vmatprep.subr.mxu0 0.0
        %1404 = vmatpush1.msra.mxu0 %v1245
        %1405 = vmatprep.subr.mxu0 0.0
        %1406 = vmatpush1.msra.mxu0 %v1246
        %1407 = vmatprep.subr.mxu0 0.0
        %1408 = vmatpush1.msra.mxu0 %v1247
        %1409 = vmatprep.subr.mxu0 0.0
        %1410 = vmatpush1.msra.mxu0 %v1248
        %1411 = vmatprep.subr.mxu0 0.0
        %1412 = vmatpush1.msra.mxu0 %v1249
        %1413 = vmatprep.subr.mxu0 0.0
        %1414 = vmatpush1.msra.mxu0 %v1250
        %1415 = vmatprep.subr.mxu0 0.0
        %1416 = vmatpush1.msra.mxu0 %v1251
        %1417 = vmatprep.subr.mxu0 0.0
        %1418 = vmatpush1.msra.mxu0 %v1252
        %1419 = vmatprep.subr.mxu0 0.0
        %1420 = vmatpush1.msra.mxu0 %v1253
        %1421 = vmatprep.subr.mxu0 0.0
        %1422 = vmatpush1.msra.mxu0 0.0
        %1423 = vmatprep.subr.mxu0 0.0
        %1424 = vmatpush1.msra.mxu0 0.0
        %1425 = vmatprep.subr.mxu0 0.0
        %1426 = vmatpush1.msra.mxu0 0.0
        %1427 = vmatprep.subr.mxu0 0.0
        %1428 = vmatpush1.msra.mxu0 0.0
        %1429 = vmatprep.subr.mxu0 0.0
        %1430 = vmatpush1.msra.mxu0 0.0
        %1431 = vmatprep.subr.mxu0 0.0
        %1432 = vmatpush1.msra.mxu0 0.0
        %1433 = vmatprep.subr.mxu0 0.0
        %1434 = vmatpush1.msra.mxu0 0.0
        %1435 = vmatprep.subr.mxu0 0.0
        %1436 = vmatpush1.msra.mxu0 0.0
        %1437 = vmatprep.mubr.f32.mxu0 %v1363
        %1438 = vmatmul.mubr.f32.gmra.mrb[0].mxu0 %v1355
        %v1439 = vpop.f32.mrb[0].mxu0
        %v1440 = vadd.f32 %v1362, %v1439
        %v1441 = vpop.f32.mrb[0].mxu0
        %1442 = vmatprep.mubr.f32.mxu0 %v1366
        %1443 = vmatmul.mubr.f32.gmra.mrb[0].mxu0 %v1356
        %v1444 = vpop.f32.mrb[0].mxu0
        %v1445 = vadd.f32 %v1362, %v1444
        %v1446 = vpop.f32.mrb[0].mxu0
        %1447 = vmatprep.mubr.f32.mxu0 %v1368
        %1448 = vmatmul.mubr.f32.gmra.mrb[0].mxu0 %v1357
        %v1449 = vpop.f32.mrb[0].mxu0
        %v1450 = vadd.f32 %v1362, %v1449
        %v1451 = vpop.f32.mrb[0].mxu0
        %1452 = vmatprep.mubr.f32.mxu0 %v1371
        %1453 = vmatmul.mubr.f32.gmra.mrb[0].mxu0 %v1358
        %v1454 = vpop.f32.mrb[0].mxu0
        %v1455 = vadd.f32 %v1362, %v1454
        %v1456 = vpop.f32.mrb[0].mxu0
        %1457 = vdwg.mxu0
        %v1458 = vadd.f32 %v1440, %v1445
        %v1459 = vrot.slane %v1458, 4
        %v1460 = vadd.f32 %v1458, %v1459
        %v1461 = vrot.slane %v1460, 2
        %v1462 = vadd.f32 %v1460, %v1461
        %v1463 = vrot.slane %v1462, 1
        %v1464 = vadd.f32 %v1462, %v1463
        %v1465 = vadd.f32 %v1450, %v1455
        %v1466 = vrot.slane %v1465, 4
        %v1467 = vadd.f32 %v1465, %v1466
        %v1468 = vrot.slane %v1467, 2
        %v1469 = vadd.f32 %v1467, %v1468
        %v1470 = vrot.slane %v1469, 1
        %v1471 = vadd.f32 %v1469, %v1470
        %v1472 = vsel %vm1323, %v1464, %v1471
        %1473 = vmatprep.subr.mxu0 0.0
        %1474 = vmatpush1.msra.mxu0 %v314
        %1475 = vmatprep.subr.mxu0 0.0
        %1476 = vmatpush1.msra.mxu0 %v315
        %1477 = vmatprep.subr.mxu0 0.0
        %1478 = vmatpush1.msra.mxu0 %v316
        %1479 = vmatprep.subr.mxu0 0.0
        %1480 = vmatpush1.msra.mxu0 %v317
        %1481 = vmatprep.subr.mxu0 0.0
        %1482 = vmatpush1.msra.mxu0 %v318
        %1483 = vmatprep.subr.mxu0 0.0
        %1484 = vmatpush1.msra.mxu0 %v319
        %1485 = vmatprep.subr.mxu0 0.0
        %1486 = vmatpush1.msra.mxu0 %v320
        %1487 = vmatprep.subr.mxu0 0.0
        %1488 = vmatpush1.msra.mxu0 %v321
        %1489 = vmatprep.subr.mxu0 0.0
        %1490 = vmatpush1.msra.mxu0 %v322
        %1491 = vmatprep.subr.mxu0 0.0
        %1492 = vmatpush1.msra.mxu0 %v323
        %1493 = vmatprep.subr.mxu0 0.0
        %1494 = vmatpush1.msra.mxu0 %v324
        %1495 = vmatprep.subr.mxu0 0.0
        %1496 = vmatpush1.msra.mxu0 %v325
        %1497 = vmatprep.subr.mxu0 0.0
        %1498 = vmatpush1.msra.mxu0 %v326
        %1499 = vmatprep.subr.mxu0 0.0
        %1500 = vmatpush1.msra.mxu0 %v327
        %1501 = vmatprep.subr.mxu0 0.0
        %1502 = vmatpush1.msra.mxu0 %v328
        %1503 = vmatprep.subr.mxu0 0.0
        %1504 = vmatpush1.msra.mxu0 %v329
        %1505 = vmatprep.subr.mxu0 0.0
        %1506 = vmatpush1.msra.mxu0 0.0
        %1507 = vmatprep.subr.mxu0 0.0
        %1508 = vmatpush1.msra.mxu0 0.0
        %1509 = vmatprep.subr.mxu0 0.0
        %1510 = vmatpush1.msra.mxu0 0.0
        %1511 = vmatprep.subr.mxu0 0.0
        %1512 = vmatpush1.msra.mxu0 0.0
        %1513 = vmatprep.subr.mxu0 0.0
        %1514 = vmatpush1.msra.mxu0 0.0
        %1515 = vmatprep.subr.mxu0 0.0
        %1516 = vmatpush1.msra.mxu0 0.0
        %1517 = vmatprep.subr.mxu0 0.0
        %1518 = vmatpush1.msra.mxu0 0.0
        %1519 = vmatprep.subr.mxu0 0.0
        %1520 = vmatpush1.msra.mxu0 0.0
        %1521 = vmatprep.subr.mxu0 0.0
        %1522 = vmatpush1.msra.mxu0 0.0
        %1523 = vmatprep.subr.mxu0 0.0
        %1524 = vmatpush1.msra.mxu0 0.0
        %1525 = vmatprep.subr.mxu0 0.0
        %1526 = vmatpush1.msra.mxu0 0.0
        %1527 = vmatprep.subr.mxu0 0.0
        %1528 = vmatpush1.msra.mxu0 0.0
        %1529 = vmatprep.subr.mxu0 0.0
        %1530 = vmatpush1.msra.mxu0 0.0
        %1531 = vmatprep.subr.mxu0 0.0
        %1532 = vmatpush1.msra.mxu0 0.0
        %1533 = vmatprep.subr.mxu0 0.0
        %1534 = vmatpush1.msra.mxu0 0.0
        %1535 = vmatprep.subr.mxu0 0.0
        %1536 = vmatpush1.msra.mxu0 0.0
        %1537 = vmatprep.mubr.f32.mxu0 0.0
        %1538 = vmatmul.mubr.f32.gmra.mrb[0].mxu0 %v1472
        %v1539 = vpop.f32.mrb[0].mxu0
        %v1540 = vadd.f32 0.0, %v1539
        %v1541 = vpop.f32.mrb[0].mxu0
        %1542 = vdwg.mxu0
        %v1543 = vmul.f32 %v1540, 0.0625
        %v1544 = vlaneseq
        %v1545 = vshrl.u32 %v1544, 7
        %v1546 = vsub.s32 0, %v1545
        %v1547 = vrot.slane %v1543, %v1546
        %v1548 = vlaneseq
        %v1549 = vshrl.u32 %v1548, 7
        %v1550 = vsub.s32 1, %v1549
        %v1551 = vrot.slane %v1543, %v1550
        %v1552 = vsub.f32 %v1440, %v1547
        %v1553 = vsub.f32 %v1445, %v1547
        %v1554 = vsub.f32 %v1450, %v1551
        %v1555 = vsub.f32 %v1455, %v1551
        %v1556 = vmul.f32 %v1552, %v1552
        %v1557 = vmul.f32 %v1553, %v1553
        %v1558 = vmul.f32 %v1554, %v1554
        %v1559 = vmul.f32 %v1555, %v1555
        %v1560 = vadd.f32 %v1556, %v1557
        %v1561 = vrot.slane %v1560, 4
        %v1562 = vadd.f32 %v1560, %v1561
        %v1563 = vrot.slane %v1562, 2
        %v1564 = vadd.f32 %v1562, %v1563
        %v1565 = vrot.slane %v1564, 1
        %v1566 = vadd.f32 %v1564, %v1565
        %v1567 = vadd.f32 %v1558, %v1559
        %v1568 = vrot.slane %v1567, 4
        %v1569 = vadd.f32 %v1567, %v1568
        %v1570 = vrot.slane %v1569, 2
        %v1571 = vadd.f32 %v1569, %v1570
        %v1572 = vrot.slane %v1571, 1
        %v1573 = vadd.f32 %v1571, %v1572
        %v1574 = vsel %vm1323, %v1566, %v1573
        %1575 = vmatprep.subr.mxu0 0.0
        %1576 = vmatpush1.msra.mxu0 %v314
        %1577 = vmatprep.subr.mxu0 0.0
        %1578 = vmatpush1.msra.mxu0 %v315
        %1579 = vmatprep.subr.mxu0 0.0
        %1580 = vmatpush1.msra.mxu0 %v316
        %1581 = vmatprep.subr.mxu0 0.0
        %1582 = vmatpush1.msra.mxu0 %v317
        %1583 = vmatprep.subr.mxu0 0.0
        %1584 = vmatpush1.msra.mxu0 %v318
        %1585 = vmatprep.subr.mxu0 0.0
        %1586 = vmatpush1.msra.mxu0 %v319
        %1587 = vmatprep.subr.mxu0 0.0
        %1588 = vmatpush1.msra.mxu0 %v320
        %1589 = vmatprep.subr.mxu0 0.0
        %1590 = vmatpush1.msra.mxu0 %v321
        %1591 = vmatprep.subr.mxu0 0.0
        %1592 = vmatpush1.msra.mxu0 %v322
        %1593 = vmatprep.subr.mxu0 0.0
        %1594 = vmatpush1.msra.mxu0 %v323
        %1595 = vmatprep.subr.mxu0 0.0
        %1596 = vmatpush1.msra.mxu0 %v324
        %1597 = vmatprep.subr.mxu0 0.0
        %1598 = vmatpush1.msra.mxu0 %v325
        %1599 = vmatprep.subr.mxu0 0.0
        %1600 = vmatpush1.msra.mxu0 %v326
        %1601 = vmatprep.subr.mxu0 0.0
        %1602 = vmatpush1.msra.mxu0 %v327
        %1603 = vmatprep.subr.mxu0 0.0
        %1604 = vmatpush1.msra.mxu0 %v328
        %1605 = vmatprep.subr.mxu0 0.0
        %1606 = vmatpush1.msra.mxu0 %v329
        %1607 = vmatprep.subr.mxu0 0.0
        %1608 = vmatpush1.msra.mxu0 0.0
        %1609 = vmatprep.subr.mxu0 0.0
        %1610 = vmatpush1.msra.mxu0 0.0
        %1611 = vmatprep.subr.mxu0 0.0
        %1612 = vmatpush1.msra.mxu0 0.0
        %1613 = vmatprep.subr.mxu0 0.0
        %1614 = vmatpush1.msra.mxu0 0.0
        %1615 = vmatprep.subr.mxu0 0.0
        %1616 = vmatpush1.msra.mxu0 0.0
        %1617 = vmatprep.subr.mxu0 0.0
        %1618 = vmatpush1.msra.mxu0 0.0
        %1619 = vmatprep.subr.mxu0 0.0
        %1620 = vmatpush1.msra.mxu0 0.0
        %1621 = vmatprep.subr.mxu0 0.0
        %1622 = vmatpush1.msra.mxu0 0.0
        %1623 = vmatprep.subr.mxu0 0.0
        %1624 = vmatpush1.msra.mxu0 0.0
        %1625 = vmatprep.subr.mxu0 0.0
        %1626 = vmatpush1.msra.mxu0 0.0
        %1627 = vmatprep.subr.mxu0 0.0
        %1628 = vmatpush1.msra.mxu0 0.0
        %1629 = vmatprep.subr.mxu0 0.0
        %1630 = vmatpush1.msra.mxu0 0.0
        %1631 = vmatprep.subr.mxu0 0.0
        %1632 = vmatpush1.msra.mxu0 0.0
        %1633 = vmatprep.subr.mxu0 0.0
        %1634 = vmatpush1.msra.mxu0 0.0
        %1635 = vmatprep.subr.mxu0 0.0
        %1636 = vmatpush1.msra.mxu0 0.0
        %1637 = vmatprep.subr.mxu0 0.0
        %1638 = vmatpush1.msra.mxu0 0.0
        %1639 = vmatprep.mubr.f32.mxu0 0.0
        %1640 = vmatmul.mubr.f32.gmra.mrb[0].mxu0 %v1574
        %v1641 = vpop.f32.mrb[0].mxu0
        %v1642 = vadd.f32 0.0, %v1641
        %v1643 = vpop.f32.mrb[0].mxu0
        %1644 = vdwg.mxu0
        %v1645 = vmul.f32 %v1642, 0.0625
        %v1646 = vadd.f32 %v1645, 1e-05
        %v1647 = vrsqrt.pop %v1646
        %v1648 = vlaneseq
        %v1649 = vshrl.u32 %v1648, 7
        %v1650 = vsub.s32 0, %v1649
        %v1651 = vrot.slane %v1647, %v1650
        %v1652 = vlaneseq
        %v1653 = vshrl.u32 %v1652, 7
        %v1654 = vsub.s32 1, %v1653
        %v1655 = vrot.slane %v1647, %v1654
        %v1656 = vmul.f32 %v1552, %v1651
        %v1657 = vmul.f32 %v1553, %v1651
        %v1658 = vmul.f32 %v1554, %v1655
        %v1659 = vmul.f32 %v1555, %v1655
        %v1660 = vlaneseq
        %v1661 = vshrl.u32 %v1660, 7
        %v1662 = vsub.s32 1, %v1661
        %v1663 = vrot.slane %v1302, %v1662
        %v1664 = vmul.f32 %v1656, %v1663
        %v1665 = vmul.f32 %v1657, %v1663
        %v1666 = vmul.f32 %v1658, %v1663
        %v1667 = vmul.f32 %v1659, %v1663
        %v1668 = vlaneseq
        %v1669 = vshrl.u32 %v1668, 7
        %v1670 = vsub.s32 2, %v1669
        %v1671 = vrot.slane %v1302, %v1670
        %v1672 = vadd.f32 %v1664, %v1671
        %v1673 = vadd.f32 %v1665, %v1671
        %v1674 = vadd.f32 %v1666, %v1671
        %v1675 = vadd.f32 %v1667, %v1671
        %vm1676 = vcmp.ge.f32.partialorder %v1672, 0.0
        %vm1677 = vcmp.ge.f32.partialorder %v1673, 0.0
        %vm1678 = vcmp.ge.f32.partialorder %v1674, 0.0
        %vm1679 = vcmp.ge.f32.partialorder %v1675, 0.0
        %v1680 = vmul.f32 %v1672, 0.2
        %v1681 = vmul.f32 %v1673, 0.2
        %v1682 = vmul.f32 %v1674, 0.2
        %v1683 = vmul.f32 %v1675, 0.2
        %v1684 = vsel %vm1676, %v1672, %v1680
        %v1685 = vsel %vm1677, %v1673, %v1681
        %v1686 = vsel %vm1678, %v1674, %v1682
        %v1687 = vsel %vm1679, %v1675, %v1683
        %v1689 = vrot.slane %v1684, 2
        %v1692 = vrot.slane %v1684, 6
        %v1693 = vrot.slane %v1685, 6
        %v1694 = vsel %vm1308, %v1692, %v1693
        %v1698 = vrot.slane %v1686, 2
        %v1701 = vrot.slane %v1686, 6
        %v1702 = vrot.slane %v1687, 6
        %v1703 = vsel %vm1308, %v1701, %v1702
        %v1706 = vsel %vm1323, %v1689, %v1684
        %v1707 = vsel %vm1308, %v1706, %v1692
        %v1708 = vsel %vm1323, %v1698, %v1686
        %v1709 = vsel %vm1308, %v1708, %v1701
        %v1710 = vrot.slane %v1685, 2
        %v1711 = vsel %vm1328, %v1689, %v1710
        %v1715 = vrot.slane %v1687, 2
        %v1716 = vsel %vm1328, %v1698, %v1715
        %v1720 = vsel %vm1328, %v1710, %v1685
        %v1721 = vsel %vm1338, %v1720, %v1693
        %v1722 = vsel %vm1328, %v1715, %v1687
        %v1723 = vsel %vm1338, %v1722, %v1702
        %v1724 = vlaneseq
        %v1725 = vshrl.u32 %v1724, 7
        %v1726 = vsub.s32 0, %v1725
        %v1727 = vrot.slane %v1303, %v1726
        %1728 = vmatprep.subr.mxu0 0.0
        %1729 = vmatpush1.msra.mxu0 %v1254
        %1730 = vmatprep.subr.mxu0 0.0
        %1731 = vmatpush1.msra.mxu0 %v1255
        %1732 = vmatprep.subr.mxu0 0.0
        %1733 = vmatpush1.msra.mxu0 %v1256
        %1734 = vmatprep.subr.mxu0 0.0
        %1735 = vmatpush1.msra.mxu0 %v1257
        %1736 = vmatprep.subr.mxu0 0.0
        %1737 = vmatpush1.msra.mxu0 %v1258
        %1738 = vmatprep.subr.mxu0 0.0
        %1739 = vmatpush1.msra.mxu0 %v1259
        %1740 = vmatprep.subr.mxu0 0.0
        %1741 = vmatpush1.msra.mxu0 %v1260
        %1742 = vmatprep.subr.mxu0 0.0
        %1743 = vmatpush1.msra.mxu0 %v1261
        %1744 = vmatprep.subr.mxu0 0.0
        %1745 = vmatpush1.msra.mxu0 %v1262
        %1746 = vmatprep.subr.mxu0 0.0
        %1747 = vmatpush1.msra.mxu0 %v1263
        %1748 = vmatprep.subr.mxu0 0.0
        %1749 = vmatpush1.msra.mxu0 %v1264
        %1750 = vmatprep.subr.mxu0 0.0
        %1751 = vmatpush1.msra.mxu0 %v1265
        %1752 = vmatprep.subr.mxu0 0.0
        %1753 = vmatpush1.msra.mxu0 %v1266
        %1754 = vmatprep.subr.mxu0 0.0
        %1755 = vmatpush1.msra.mxu0 %v1267
        %1756 = vmatprep.subr.mxu0 0.0
        %1757 = vmatpush1.msra.mxu0 %v1268
        %1758 = vmatprep.subr.mxu0 0.0
        %1759 = vmatpush1.msra.mxu0 %v1269
        %1760 = vmatprep.subr.mxu0 0.0
        %1761 = vmatpush1.msra.mxu0 %v1270
        %1762 = vmatprep.subr.mxu0 0.0
        %1763 = vmatpush1.msra.mxu0 %v1271
        %1764 = vmatprep.subr.mxu0 0.0
        %1765 = vmatpush1.msra.mxu0 %v1272
        %1766 = vmatprep.subr.mxu0 0.0
        %1767 = vmatpush1.msra.mxu0 %v1273
        %1768 = vmatprep.subr.mxu0 0.0
        %1769 = vmatpush1.msra.mxu0 %v1274
        %1770 = vmatprep.subr.mxu0 0.0
        %1771 = vmatpush1.msra.mxu0 %v1275
        %1772 = vmatprep.subr.mxu0 0.0
        %1773 = vmatpush1.msra.mxu0 %v1276
        %1774 = vmatprep.subr.mxu0 0.0
        %1775 = vmatpush1.msra.mxu0 %v1277
        %1776 = vmatprep.subr.mxu0 0.0
        %1777 = vmatpush1.msra.mxu0 %v1278
        %1778 = vmatprep.subr.mxu0 0.0
        %1779 = vmatpush1.msra.mxu0 %v1279
        %1780 = vmatprep.subr.mxu0 0.0
        %1781 = vmatpush1.msra.mxu0 %v1280
        %1782 = vmatprep.subr.mxu0 0.0
        %1783 = vmatpush1.msra.mxu0 %v1281
        %1784 = vmatprep.subr.mxu0 0.0
        %1785 = vmatpush1.msra.mxu0 %v1282
        %1786 = vmatprep.subr.mxu0 0.0
        %1787 = vmatpush1.msra.mxu0 %v1283
        %1788 = vmatprep.subr.mxu0 0.0
        %1789 = vmatpush1.msra.mxu0 %v1284
        %1790 = vmatprep.subr.mxu0 0.0
        %1791 = vmatpush1.msra.mxu0 %v1285
        %1792 = vmatprep.mubr.f32.mxu0 %v1684
        %1793 = vmatmul.mubr.f32.gmra.mrb[0].mxu0 %v1707
        %v1794 = vpop.f32.mrb[0].mxu0
        %v1795 = vadd.f32 %v1727, %v1794
        %v1796 = vpop.f32.mrb[0].mxu0
        %1797 = vmatprep.mubr.f32.mxu0 %v1685
        %1798 = vmatmul.mubr.f32.gmra.mrb[0].mxu0 %v1694
        %v1799 = vpop.f32.mrb[0].mxu0
        %v1800 = vadd.f32 %v1727, %v1799
        %v1801 = vpop.f32.mrb[0].mxu0
        %1802 = vmatprep.mubr.f32.mxu0 %v1686
        %1803 = vmatmul.mubr.f32.gmra.mrb[0].mxu0 %v1709
        %v1804 = vpop.f32.mrb[0].mxu0
        %v1805 = vadd.f32 %v1727, %v1804
        %v1806 = vpop.f32.mrb[0].mxu0
        %1807 = vmatprep.mubr.f32.mxu0 %v1687
        %1808 = vmatmul.mubr.f32.gmra.mrb[0].mxu0 %v1703
        %v1809 = vpop.f32.mrb[0].mxu0
        %v1810 = vadd.f32 %v1727, %v1809
        %v1811 = vpop.f32.mrb[0].mxu0
        %1812 = vdwg.mxu0
        %1813 = vmatprep.subr.mxu0 0.0
        %1814 = vmatpush1.msra.mxu0 %v1286
        %1815 = vmatprep.subr.mxu0 0.0
        %1816 = vmatpush1.msra.mxu0 %v1287
        %1817 = vmatprep.subr.mxu0 0.0
        %1818 = vmatpush1.msra.mxu0 %v1288
        %1819 = vmatprep.subr.mxu0 0.0
        %1820 = vmatpush1.msra.mxu0 %v1289
        %1821 = vmatprep.subr.mxu0 0.0
        %1822 = vmatpush1.msra.mxu0 %v1290
        %1823 = vmatprep.subr.mxu0 0.0
        %1824 = vmatpush1.msra.mxu0 %v1291
        %1825 = vmatprep.subr.mxu0 0.0
        %1826 = vmatpush1.msra.mxu0 %v1292
        %1827 = vmatprep.subr.mxu0 0.0
        %1828 = vmatpush1.msra.mxu0 %v1293
        %1829 = vmatprep.subr.mxu0 0.0
        %1830 = vmatpush1.msra.mxu0 %v1294
        %1831 = vmatprep.subr.mxu0 0.0
        %1832 = vmatpush1.msra.mxu0 %v1295
        %1833 = vmatprep.subr.mxu0 0.0
        %1834 = vmatpush1.msra.mxu0 %v1296
        %1835 = vmatprep.subr.mxu0 0.0
        %1836 = vmatpush1.msra.mxu0 %v1297
        %1837 = vmatprep.subr.mxu0 0.0
        %1838 = vmatpush1.msra.mxu0 %v1298
        %1839 = vmatprep.subr.mxu0 0.0
        %1840 = vmatpush1.msra.mxu0 %v1299
        %1841 = vmatprep.subr.mxu0 0.0
        %1842 = vmatpush1.msra.mxu0 %v1300
        %1843 = vmatprep.subr.mxu0 0.0
        %1844 = vmatpush1.msra.mxu0 %v1301
        %1845 = vmatprep.subr.mxu0 0.0
        %1846 = vmatpush1.msra.mxu0 0.0
        %1847 = vmatprep.subr.mxu0 0.0
        %1848 = vmatpush1.msra.mxu0 0.0
        %1849 = vmatprep.subr.mxu0 0.0
        %1850 = vmatpush1.msra.mxu0 0.0
        %1851 = vmatprep.subr.mxu0 0.0
        %1852 = vmatpush1.msra.mxu0 0.0
        %1853 = vmatprep.subr.mxu0 0.0
        %1854 = vmatpush1.msra.mxu0 0.0
        %1855 = vmatprep.subr.mxu0 0.0
        %1856 = vmatpush1.msra.mxu0 0.0
        %1857 = vmatprep.subr.mxu0 0.0
        %1858 = vmatpush1.msra.mxu0 0.0
        %1859 = vmatprep.subr.mxu0 0.0
        %1860 = vmatpush1.msra.mxu0 0.0
        %1861 = vmatprep.subr.mxu0 0.0
        %1862 = vmatpush1.msra.mxu0 0.0
        %1863 = vmatprep.subr.mxu0 0.0
        %1864 = vmatpush1.msra.mxu0 0.0
        %1865 = vmatprep.subr.mxu0 0.0
        %1866 = vmatpush1.msra.mxu0 0.0
        %1867 = vmatprep.subr.mxu0 0.0
        %1868 = vmatpush1.msra.mxu0 0.0
        %1869 = vmatprep.subr.mxu0 0.0
        %1870 = vmatpush1.msra.mxu0 0.0
        %1871 = vmatprep.subr.mxu0 0.0
        %1872 = vmatpush1.msra.mxu0 0.0
        %1873 = vmatprep.subr.mxu0 0.0
        %1874 = vmatpush1.msra.mxu0 0.0
        %1875 = vmatprep.subr.mxu0 0.0
        %1876 = vmatpush1.msra.mxu0 0.0
        %1877 = vmatprep.mubr.f32.mxu0 0.0
        %1878 = vmatmul.mubr.f32.gmra.mrb[0].mxu0 %v1711
        %v1879 = vpop.f32.mrb[0].mxu0
        %v1880 = vadd.f32 %v1795, %v1879
        %v1881 = vpop.f32.mrb[0].mxu0
        %1882 = vmatprep.mubr.f32.mxu0 0.0
        %1883 = vmatmul.mubr.f32.gmra.mrb[0].mxu0 %v1721
        %v1884 = vpop.f32.mrb[0].mxu0
        %v1885 = vadd.f32 %v1800, %v1884
        %v1886 = vpop.f32.mrb[0].mxu0
        %1887 = vmatprep.mubr.f32.mxu0 0.0
        %1888 = vmatmul.mubr.f32.gmra.mrb[0].mxu0 %v1716
        %v1889 = vpop.f32.mrb[0].mxu0
        %v1890 = vadd.f32 %v1805, %v1889
        %v1891 = vpop.f32.mrb[0].mxu0
        %1892 = vmatprep.mubr.f32.mxu0 0.0
        %1893 = vmatmul.mubr.f32.gmra.mrb[0].mxu0 %v1723
        %v1894 = vpop.f32.mrb[0].mxu0
        %v1895 = vadd.f32 %v1810, %v1894
        %v1896 = vpop.f32.mrb[0].mxu0
        %1897 = vdwg.mxu0
        %v1898 = vadd.f32 %v1880, %v1885
        %v1899 = vrot.slane %v1898, 4
        %v1900 = vadd.f32 %v1898, %v1899
        %v1901 = vrot.slane %v1900, 2
        %v1902 = vadd.f32 %v1900, %v1901
        %v1903 = vrot.slane %v1902, 1
        %v1904 = vadd.f32 %v1902, %v1903
        %v1905 = vadd.f32 %v1890, %v1895
        %v1906 = vrot.slane %v1905, 4
        %v1907 = vadd.f32 %v1905, %v1906
        %v1908 = vrot.slane %v1907, 2
        %v1909 = vadd.f32 %v1907, %v1908
        %v1910 = vrot.slane %v1909, 1
        %v1911 = vadd.f32 %v1909, %v1910
        %v1912 = vsel %vm1323, %v1904, %v1911
        %1913 = vmatprep.subr.mxu0 0.0
        %1914 = vmatpush1.msra.mxu0 %v314
        %1915 = vmatprep.subr.mxu0 0.0
        %1916 = vmatpush1.msra.mxu0 %v315
        %1917 = vmatprep.subr.mxu0 0.0
        %1918 = vmatpush1.msra.mxu0 %v316
        %1919 = vmatprep.subr.mxu0 0.0
        %1920 = vmatpush1.msra.mxu0 %v317
        %1921 = vmatprep.subr.mxu0 0.0
        %1922 = vmatpush1.msra.mxu0 %v318
        %1923 = vmatprep.subr.mxu0 0.0
        %1924 = vmatpush1.msra.mxu0 %v319
        %1925 = vmatprep.subr.mxu0 0.0
        %1926 = vmatpush1.msra.mxu0 %v320
        %1927 = vmatprep.subr.mxu0 0.0
        %1928 = vmatpush1.msra.mxu0 %v321
        %1929 = vmatprep.subr.mxu0 0.0
        %1930 = vmatpush1.msra.mxu0 %v322
        %1931 = vmatprep.subr.mxu0 0.0
        %1932 = vmatpush1.msra.mxu0 %v323
        %1933 = vmatprep.subr.mxu0 0.0
        %1934 = vmatpush1.msra.mxu0 %v324
        %1935 = vmatprep.subr.mxu0 0.0
        %1936 = vmatpush1.msra.mxu0 %v325
        %1937 = vmatprep.subr.mxu0 0.0
        %1938 = vmatpush1.msra.mxu0 %v326
        %1939 = vmatprep.subr.mxu0 0.0
        %1940 = vmatpush1.msra.mxu0 %v327
        %1941 = vmatprep.subr.mxu0 0.0
        %1942 = vmatpush1.msra.mxu0 %v328
        %1943 = vmatprep.subr.mxu0 0.0
        %1944 = vmatpush1.msra.mxu0 %v329
        %1945 = vmatprep.subr.mxu0 0.0
        %1946 = vmatpush1.msra.mxu0 0.0
        %1947 = vmatprep.subr.mxu0 0.0
        %1948 = vmatpush1.msra.mxu0 0.0
        %1949 = vmatprep.subr.mxu0 0.0
        %1950 = vmatpush1.msra.mxu0 0.0
        %1951 = vmatprep.subr.mxu0 0.0
        %1952 = vmatpush1.msra.mxu0 0.0
        %1953 = vmatprep.subr.mxu0 0.0
        %1954 = vmatpush1.msra.mxu0 0.0
        %1955 = vmatprep.subr.mxu0 0.0
        %1956 = vmatpush1.msra.mxu0 0.0
        %1957 = vmatprep.subr.mxu0 0.0
        %1958 = vmatpush1.msra.mxu0 0.0
        %1959 = vmatprep.subr.mxu0 0.0
        %1960 = vmatpush1.msra.mxu0 0.0
        %1961 = vmatprep.subr.mxu0 0.0
        %1962 = vmatpush1.msra.mxu0 0.0
        %1963 = vmatprep.subr.mxu0 0.0
        %1964 = vmatpush1.msra.mxu0 0.0
        %1965 = vmatprep.subr.mxu0 0.0
        %1966 = vmatpush1.msra.mxu0 0.0
        %1967 = vmatprep.subr.mxu0 0.0
        %1968 = vmatpush1.msra.mxu0 0.0
        %1969 = vmatprep.subr.mxu0 0.0
        %1970 = vmatpush1.msra.mxu0 0.0
        %1971 = vmatprep.subr.mxu0 0.0
        %1972 = vmatpush1.msra.mxu0 0.0
        %1973 = vmatprep.subr.mxu0 0.0
        %1974 = vmatpush1.msra.mxu0 0.0
        %1975 = vmatprep.subr.mxu0 0.0
        %1976 = vmatpush1.msra.mxu0 0.0
        %1977 = vmatprep.mubr.f32.mxu0 0.0
        %1978 = vmatmul.mubr.f32.gmra.mrb[0].mxu0 %v1912
        %v1979 = vpop.f32.mrb[0].mxu0
        %v1980 = vadd.f32 0.0, %v1979
        %v1981 = vpop.f32.mrb[0].mxu0
        %1982 = vdwg.mxu0
        %v1983 = vmul.f32 %v1980, 0.0625
        %v1984 = vlaneseq
        %v1985 = vshrl.u32 %v1984, 7
        %v1986 = vsub.s32 0, %v1985
        %v1987 = vrot.slane %v1983, %v1986
        %v1988 = vlaneseq
        %v1989 = vshrl.u32 %v1988, 7
        %v1990 = vsub.s32 1, %v1989
        %v1991 = vrot.slane %v1983, %v1990
        %v1992 = vsub.f32 %v1880, %v1987
        %v1993 = vsub.f32 %v1885, %v1987
        %v1994 = vsub.f32 %v1890, %v1991
        %v1995 = vsub.f32 %v1895, %v1991
        %v1996 = vmul.f32 %v1992, %v1992
        %v1997 = vmul.f32 %v1993, %v1993
        %v1998 = vmul.f32 %v1994, %v1994
        %v1999 = vmul.f32 %v1995, %v1995
        %v2000 = vadd.f32 %v1996, %v1997
        %v2001 = vrot.slane %v2000, 4
        %v2002 = vadd.f32 %v2000, %v2001
        %v2003 = vrot.slane %v2002, 2
        %v2004 = vadd.f32 %v2002, %v2003
        %v2005 = vrot.slane %v2004, 1
        %v2006 = vadd.f32 %v2004, %v2005
        %v2007 = vadd.f32 %v1998, %v1999
        %v2008 = vrot.slane %v2007, 4
        %v2009 = vadd.f32 %v2007, %v2008
        %v2010 = vrot.slane %v2009, 2
        %v2011 = vadd.f32 %v2009, %v2010
        %v2012 = vrot.slane %v2011, 1
        %v2013 = vadd.f32 %v2011, %v2012
        %v2014 = vsel %vm1323, %v2006, %v2013
        %2015 = vmatprep.subr.mxu0 0.0
        %2016 = vmatpush1.msra.mxu0 %v314
        %2017 = vmatprep.subr.mxu0 0.0
        %2018 = vmatpush1.msra.mxu0 %v315
        %2019 = vmatprep.subr.mxu0 0.0
        %2020 = vmatpush1.msra.mxu0 %v316
        %2021 = vmatprep.subr.mxu0 0.0
        %2022 = vmatpush1.msra.mxu0 %v317
        %2023 = vmatprep.subr.mxu0 0.0
        %2024 = vmatpush1.msra.mxu0 %v318
        %2025 = vmatprep.subr.mxu0 0.0
        %2026 = vmatpush1.msra.mxu0 %v319
        %2027 = vmatprep.subr.mxu0 0.0
        %2028 = vmatpush1.msra.mxu0 %v320
        %2029 = vmatprep.subr.mxu0 0.0
        %2030 = vmatpush1.msra.mxu0 %v321
        %2031 = vmatprep.subr.mxu0 0.0
        %2032 = vmatpush1.msra.mxu0 %v322
        %2033 = vmatprep.subr.mxu0 0.0
        %2034 = vmatpush1.msra.mxu0 %v323
        %2035 = vmatprep.subr.mxu0 0.0
        %2036 = vmatpush1.msra.mxu0 %v324
        %2037 = vmatprep.subr.mxu0 0.0
        %2038 = vmatpush1.msra.mxu0 %v325
        %2039 = vmatprep.subr.mxu0 0.0
        %2040 = vmatpush1.msra.mxu0 %v326
        %2041 = vmatprep.subr.mxu0 0.0
        %2042 = vmatpush1.msra.mxu0 %v327
        %2043 = vmatprep.subr.mxu0 0.0
        %2044 = vmatpush1.msra.mxu0 %v328
        %2045 = vmatprep.subr.mxu0 0.0
        %2046 = vmatpush1.msra.mxu0 %v329
        %2047 = vmatprep.subr.mxu0 0.0
        %2048 = vmatpush1.msra.mxu0 0.0
        %2049 = vmatprep.subr.mxu0 0.0
        %2050 = vmatpush1.msra.mxu0 0.0
        %2051 = vmatprep.subr.mxu0 0.0
        %2052 = vmatpush1.msra.mxu0 0.0
        %2053 = vmatprep.subr.mxu0 0.0
        %2054 = vmatpush1.msra.mxu0 0.0
        %2055 = vmatprep.subr.mxu0 0.0
        %2056 = vmatpush1.msra.mxu0 0.0
        %2057 = vmatprep.subr.mxu0 0.0
        %2058 = vmatpush1.msra.mxu0 0.0
        %2059 = vmatprep.subr.mxu0 0.0
        %2060 = vmatpush1.msra.mxu0 0.0
        %2061 = vmatprep.subr.mxu0 0.0
        %2062 = vmatpush1.msra.mxu0 0.0
        %2063 = vmatprep.subr.mxu0 0.0
        %2064 = vmatpush1.msra.mxu0 0.0
        %2065 = vmatprep.subr.mxu0 0.0
        %2066 = vmatpush1.msra.mxu0 0.0
        %2067 = vmatprep.subr.mxu0 0.0
        %2068 = vmatpush1.msra.mxu0 0.0
        %2069 = vmatprep.subr.mxu0 0.0
        %2070 = vmatpush1.msra.mxu0 0.0
        %2071 = vmatprep.subr.mxu0 0.0
        %2072 = vmatpush1.msra.mxu0 0.0
        %2073 = vmatprep.subr.mxu0 0.0
        %2074 = vmatpush1.msra.mxu0 0.0
        %2075 = vmatprep.subr.mxu0 0.0
        %2076 = vmatpush1.msra.mxu0 0.0
        %2077 = vmatprep.subr.mxu0 0.0
        %2078 = vmatpush1.msra.mxu0 0.0
        %2079 = vmatprep.mubr.f32.mxu0 0.0
        %2080 = vmatmul.mubr.f32.gmra.mrb[0].mxu0 %v2014
        %v2081 = vpop.f32.mrb[0].mxu0
        %v2082 = vadd.f32 0.0, %v2081
        %v2083 = vpop.f32.mrb[0].mxu0
        %2084 = vdwg.mxu0
        %v2085 = vmul.f32 %v2082, 0.0625
        %v2086 = vadd.f32 %v2085, 1e-05
        %v2087 = vrsqrt.pop %v2086
        %v2088 = vlaneseq
        %v2089 = vshrl.u32 %v2088, 7
        %v2090 = vsub.s32 0, %v2089
        %v2091 = vrot.slane %v2087, %v2090
        %v2092 = vlaneseq
        %v2093 = vshrl.u32 %v2092, 7
        %v2094 = vsub.s32 1, %v2093
        %v2095 = vrot.slane %v2087, %v2094
        %v2096 = vmul.f32 %v1992, %v2091
        %v2097 = vmul.f32 %v1993, %v2091
        %v2098 = vmul.f32 %v1994, %v2095
        %v2099 = vmul.f32 %v1995, %v2095
        %v2100 = vlaneseq
        %v2101 = vshrl.u32 %v2100, 7
        %v2102 = vsub.s32 1, %v2101
        %v2103 = vrot.slane %v1303, %v2102
        %v2104 = vmul.f32 %v2096, %v2103
        %v2105 = vmul.f32 %v2097, %v2103
        %v2106 = vmul.f32 %v2098, %v2103
        %v2107 = vmul.f32 %v2099, %v2103
        %v2108 = vlaneseq
        %v2109 = vshrl.u32 %v2108, 7
        %v2110 = vsub.s32 2, %v2109
        %v2111 = vrot.slane %v1303, %v2110
        %v2112 = vadd.f32 %v2104, %v2111
        %v2113 = vadd.f32 %v2105, %v2111
        %v2114 = vadd.f32 %v2106, %v2111
        %v2115 = vadd.f32 %v2107, %v2111
        %vm2116 = vcmp.ge.f32.partialorder %v2112, 0.0
        %vm2117 = vcmp.ge.f32.partialorder %v2113, 0.0
        %vm2118 = vcmp.ge.f32.partialorder %v2114, 0.0
        %vm2119 = vcmp.ge.f32.partialorder %v2115, 0.0
        %v2120 = vmul.f32 %v2112, 0.2
        %v2121 = vmul.f32 %v2113, 0.2
        %v2122 = vmul.f32 %v2114, 0.2
        %v2123 = vmul.f32 %v2115, 0.2
        %v2124 = vsel %vm2116, %v2112, %v2120
        %v2125 = vsel %vm2117, %v2113, %v2121
        %v2126 = vsel %vm2118, %v2114, %v2122
        %v2127 = vsel %vm2119, %v2115, %v2123
        %2128 = vst [vmem:[%s308] sm:$0xff] %v2124
        %2129 = vst [vmem:[%s308 + $0x8] sm:$0xff] %v2125
        %2130 = vst [vmem:[%s308 + $0x10] sm:$0xff] %v2126
        %2131 = vst [vmem:[%s308 + $0x18] sm:$0xff] %v2127
      $region48: #{conv_multi_block_pallas.1} parent=39 // pred_fallthru
        _
      %s2132 = smul.u32 4, %s21
      %p2133 = scmp.lt.s32.totalorder %s20, 1
      %s2134 = scalar_select %p2133, %s20, 1
      %p2135 = scmp.lt.s32.totalorder %s2132, 3
      %s2136 = scalar_select %p2135, %s2132, 3
      %s2137 = smul.addr %s2134, 4
      %s2138 = sadd.s32 %s2136, %s2137
      %s2139 = smul.addr %s2138, 8
      %s2140 = scalar_lea.vmem %s5, %s2139
      // Predicated region
      $region49: #{conv_multi_block_pallas.1} parent=39 // pred_check
        %p2141 = pneg %p173
      $region50: #{conv_multi_block_pallas.1} parent=39 // pred_check_branch
        %2143 = sbr.rel (%p2141) target = $region52
      $region51: #{conv_multi_block_pallas.1} parent=39 // pred_region
        %s2144 = smul.u32 4, %s21
      $region52: #{conv_multi_block_pallas.1} parent=39 // pred_fallthru
        _
    $region40: #{conv_multi_block_pallas.1} parent=5 // pred_fallthru
      _
    %p2145 = scmp.le.s32.totalorder 2, %s11
    // Predicated region
    $region53: #{conv_multi_block_pallas.1} parent=5 // pred_check
      %p2146 = pneg %p2145
    $region54: #{conv_multi_block_pallas.1} parent=5 // pred_check_branch
      %2148 = sbr.rel (%p2146) target = $region56
    $region55: #{conv_multi_block_pallas.1} parent=5 // pred_region
      %s2149 = ssub.s32 %s11, 2
      // Predicated region
      $region57: #{conv_multi_block_pallas.1} parent=55 // pred_check
        %p2150 = pneg %p179
      $region58: #{conv_multi_block_pallas.1} parent=55 // pred_check_branch
        %2152 = sbr.rel (%p2150) target = $region60
      $region59: #{conv_multi_block_pallas.1} parent=55 // pred_region
        %s2153 = smul.u32 4, %s23
        %p2154 = scmp.lt.s32.totalorder %s22, 1
        %s2155 = scalar_select %p2154, %s22, 1
        %p2156 = scmp.lt.s32.totalorder %s2153, 3
        %s2157 = scalar_select %p2156, %s2153, 3
        %s2158 = smul.addr %s2155, 4
        %s2159 = sadd.s32 %s2157, %s2158
        %s2160 = smul.addr %s2159, 8
        %s2161 = scalar_lea.vmem %s5, %s2160
      $region60: #{conv_multi_block_pallas.1} parent=55 // pred_fallthru
        _
    $region56: #{conv_multi_block_pallas.1} parent=5 // pred_fallthru
      _
  $region6: #{conv_multi_block_pallas.1} parent=0 // loop_footer
    %s15 = sadd.s32 1, %s11
  $region7: #{conv_multi_block_pallas.1} parent=0 // loop_footer_branch
    %10 = sbr.rel target = $region3
  $region8: #{conv_multi_block_pallas.1} parent=0 // loop_exit
    _

</llo_original>
